<compile_context>
chip_gen: v7x
topology: tpu7x:2x2x1
jax: 0.10.0
libtpu: 0.0.40
codegen_flags: <defaults>
</compile_context>

<pallas_src>
import functools

import jax
import jax.numpy as jnp
import numpy as np
from jax.experimental import pallas as pl
from jax.experimental.pallas import tpu as pltpu


# -----------------------------------------------------------------------------
# Pallas kernel: full residual MLP forward for one batch tile (batch in lanes).
# -----------------------------------------------------------------------------
def _resnet_relu_kernel(
    xT_ref,            # (dim, TN) f32 — x transposed tile (batch in lanes)
    w1_ref, b1_ref,    # (m, dim) f32, (m, 1) f32   (fc1 runs on the VPU)
    w2_ref, b2_ref,    # (m, m)  bf16, (m, 1) f32
    w3_ref, b3_ref,
    w4_ref, b4_ref,
    w5_ref, b5_ref,
    w6_ref, b6_ref,
    wout_ref,          # (m, 1) f32 — outlayer weight column
    o_ref,             # (1, TN) f32 — lane-dense output row
    *,
    degree: int,
):
    dim, tn = xT_ref.shape
    m = w1_ref.shape[0]

    def act(v):
        # relu(v ** degree); degree is a static Python int (default 1).
        vv = v if degree == 1 else v ** degree
        return jnp.maximum(vv, 0.0)

    def linear(v, w_ref, b_ref):
        # (m, m) bf16 @ (m, TN) bf16 on the MXU, f32 accumulation, f32 bias.
        return (
            jnp.dot(w_ref[...], v.astype(jnp.bfloat16),
                    preferred_element_type=jnp.float32)
            + b_ref[...]                       # (m, 1) broadcasts over lanes
        )

    xT = xT_ref[...]                           # (dim, TN) f32

    # s = (x @ Ix)^T : rows 0/1 hold x[:,0]/x[:,1], remaining rows are zero.
    s = jnp.concatenate(
        [xT[0:2, :], jnp.zeros((m - 2, tn), jnp.float32)], axis=0)

    # fc1 (contraction K = dim = 2): VPU broadcast-FMAs, no MXU pass.
    y = b1_ref[...] + w1_ref[:, 0:1] * xT[0:1, :]
    for d in range(1, dim):
        y = y + w1_ref[:, d:d + 1] * xT[d:d + 1, :]
    y = act(y)

    # residual block 1
    y = act(linear(y, w2_ref, b2_ref)) + s
    s = y
    # residual block 2
    y = act(linear(y, w3_ref, b3_ref))
    y = act(linear(y, w4_ref, b4_ref)) + s
    s = y
    # residual block 3
    y = act(linear(y, w5_ref, b5_ref))
    y = act(linear(y, w6_ref, b6_ref)) + s

    # outlayer (no bias): f32 sublane reduce over m -> lane-dense (1, TN) row.
    o_ref[...] = jnp.sum(wout_ref[...] * y, axis=0, keepdims=True)


# -----------------------------------------------------------------------------
# Wrapper helpers
# -----------------------------------------------------------------------------
def _pad_to(v, mult):
    return ((v + mult - 1) // mult) * mult


def _vmem_cap_bytes():
    """Physical VMEM capacity per TensorCore; conservative fallback 64 MiB."""
    try:
        return int(pltpu.get_tpu_info().vmem_capacity_bytes)
    except Exception:
        return 64 * 1024 * 1024


def _estimate_vmem_bytes(tile_n, dim, m):
    """Rough VMEM budget: (8,128)-padded tiles + activation temp headroom."""
    def tb(rows, cols, itemsize):
        return _pad_to(rows, 8) * _pad_to(cols, 128) * itemsize

    total = 0
    total += 2 * tb(dim, tile_n, 4)     # x^T tile (f32), double buffered
    total += 2 * tb(m, dim, 4)          # w1 (f32)
    total += 2 * 5 * tb(m, m, 2)        # w2..w6 (bf16)
    total += 2 * 6 * tb(m, 1, 4)        # biases (f32)
    total += 2 * tb(m, 1, 4)            # outlayer weight (f32)
    total += 2 * tb(1, tile_n, 4)       # output row, double buffered
    total += 6 * tb(m, tile_n, 4)       # live activation temporaries
    return total


def _resnet_pallas_call(xT, p, *, degree, tile_n):
    dim, N = xT.shape
    m = p["w1"].shape[1]
    bf = jnp.bfloat16
    f32 = jnp.float32

    def resident(shape):
        # Grid-invariant block: constant index_map -> fetched once, stays in VMEM.
        zero = (0,) * len(shape)
        return pl.BlockSpec(shape, lambda i, _z=zero: _z)

    in_specs = [
        pl.BlockSpec((dim, tile_n), lambda i: (0, i)),   # x^T tile
        resident((m, dim)), resident((m, 1)),            # fc1
        resident((m, m)), resident((m, 1)),              # fc2
        resident((m, m)), resident((m, 1)),              # fc3
        resident((m, m)), resident((m, 1)),              # fc4
        resident((m, m)), resident((m, 1)),              # fc5
        resident((m, m)), resident((m, 1)),              # fc6
        resident((m, 1)),                                # outlayer weight
    ]

    cap = _vmem_cap_bytes()
    est = _estimate_vmem_bytes(tile_n, dim, m)
    vmem_limit = int(min(max(4 * est, 16 * 1024 * 1024), int(0.75 * cap)))

    # Pre-transposed (out_features, in_features) weights -> y_new = W @ y_old.
    def wT(name):
        return p[name].T.astype(bf)

    def bcol(name):
        return p[name].reshape(m, 1).astype(f32)

    return pl.pallas_call(
        functools.partial(_resnet_relu_kernel, degree=degree),
        out_shape=jax.ShapeDtypeStruct((1, N), f32),
        grid_spec=pltpu.PrefetchScalarGridSpec(
            num_scalar_prefetch=0,
            grid=(N // tile_n,),
            in_specs=in_specs,
            out_specs=pl.BlockSpec((1, tile_n), lambda i: (0, i)),
        ),
        compiler_params=pltpu.CompilerParams(
            dimension_semantics=("parallel",),
            vmem_limit_bytes=vmem_limit,
        ),
    )(
        xT.astype(f32),
        p["w1"].T.astype(f32), bcol("b1"),
        wT("w2"), bcol("b2"),
        wT("w3"), bcol("b3"),
        wT("w4"), bcol("b4"),
        wT("w5"), bcol("b5"),
        wT("w6"), bcol("b6"),
        p["wout"].astype(f32),           # already (m, 1)
    )


# -----------------------------------------------------------------------------
# Public forward (single jit; no host syncs or retries in the hot path)
# -----------------------------------------------------------------------------
@functools.partial(
    jax.jit, static_argnames=("degree", "boundary_control_type", "tile_n"))
def resnet_relu_base_forward(
    x, params, *, degree=1, boundary_control_type="none", tile_n=256
):
    """Forward pass of ResNet_Relu_base.  x: (N, dim) f32, returns (N,) f32."""
    N, dim = x.shape
    if tile_n % 128 != 0:
        raise ValueError("tile_n must be a multiple of 128 (lane alignment)")
    if N % tile_n != 0:
        raise ValueError("batch must be divisible by tile_n for this demo")

    xT = jnp.transpose(x)   # (dim, N): batch in lanes, lane-dense DMA tiles
    y2d = _resnet_pallas_call(xT, params, degree=degree, tile_n=tile_n)
    y = y2d[0, :]           # == outlayer(y).squeeze(1)

    # boundary-control post-processing: pure elementwise glue, plain JAX.
    if boundary_control_type == "none":
        return y
    elif boundary_control_type == "net_u":
        x1, x2 = x[:, 0], x[:, 1]
        r = (x1 ** 2 + x2 ** 2) ** 1 / 2          # matches the PyTorch precedence bug
        base = jnp.where(x1 > -0.5, 0.0, 1.0)
        return (np.pi / 2 - jnp.arctan(-x1 / x2)) * jnp.sin(np.pi / 2 * r) * y + base
    elif boundary_control_type == "net_v":
        x1, x2 = x[:, 0], x[:, 1]
        return (-np.pi / 2 - jnp.arctan(-x1 / x2)) * y
    else:
        # TODO(synk): PyTorch 'cube' default falls through and returns None;
        # we return y (the 'none' behavior) instead of faking a None result.
        return y


# -----------------------------------------------------------------------------
# Deterministic parameter init + precision-matched reference
# -----------------------------------------------------------------------------
def init_params(key, dim, m):
    keys = jax.random.split(key, 13)

    def lin(kw, kb, fan_in, fan_out):
        bound = 1.0 / np.sqrt(fan_in)
        w = jax.random.uniform(kw, (fan_in, fan_out), jnp.float32, -bound, bound)
        b = jax.random.uniform(kb, (1, fan_out), jnp.float32, -bound, bound)
        return w, b

    p = {}
    p["w1"], p["b1"] = lin(keys[0], keys[1], dim, m)
    p["w2"], p["b2"] = lin(keys[2], keys[3], m, m)
    p["w3"], p["b3"] = lin(keys[4], keys[5], m, m)
    p["w4"], p["b4"] = lin(keys[6], keys[7], m, m)
    p["w5"], p["b5"] = lin(keys[8], keys[9], m, m)
    p["w6"], p["b6"] = lin(keys[10], keys[11], m, m)
    bound = 1.0 / np.sqrt(m)
    p["wout"] = jax.random.uniform(keys[12], (m, 1), jnp.float32, -bound, bound)

    ix = jnp.zeros((dim, m), jnp.float32)
    ix = ix.at[0, 0].set(1.0).at[1, 1].set(1.0)
    p["Ix"] = ix                      # only used by the pure-JAX reference
    return p


def reference_forward(x, p, degree=1):
    """Pure-JAX reference mirroring the kernel's precision choices
    (f32 fc1, bf16 operands / f32 accumulation for fc2..fc6, f32 outlayer)."""
    bf = jnp.bfloat16

    def act(v):
        vv = v if degree == 1 else v ** degree
        return jnp.maximum(vv, 0.0)

    def lin_bf16(v, w, b):
        return jnp.dot(v.astype(bf), w.astype(bf),
                       preferred_element_type=jnp.float32) + b

    s = x @ p["Ix"]
    y = act(x @ p["w1"] + p["b1"])                 # fc1 stays f32 (kernel: VPU FMA)
    y = act(lin_bf16(y, p["w2"], p["b2"])) + s
    s = y
    y = act(lin_bf16(y, p["w3"], p["b3"]))
    y = act(lin_bf16(y, p["w4"], p["b4"])) + s
    s = y
    y = act(lin_bf16(y, p["w5"], p["b5"]))
    y = act(lin_bf16(y, p["w6"], p["b6"])) + s
    return (y @ p["wout"])[:, 0]                   # outlayer f32 (kernel: f32 reduce)


if __name__ == "__main__":
    key = jax.random.PRNGKey(0)
    kx, kp = jax.random.split(key)

    # Small model; batch sized so the grid has 8 x 256-column tiles
    # (>=4 pipelined steps per TensorCore on dual-TC v7x).
    N, dim, m = 2048, 2, 32
    tile_n = 256

    x = jax.random.uniform(kx, (N, dim), jnp.float32, -1.0, 1.0)
    params = init_params(kp, dim, m)

    out = resnet_relu_base_forward(
        x, params, degree=1, boundary_control_type="none", tile_n=tile_n
    )
    out = jax.block_until_ready(out)

    ref = reference_forward(x, params, degree=1)
    np.testing.assert_allclose(
        np.asarray(out, dtype=np.float32),
        np.asarray(ref, dtype=np.float32),
        rtol=2e-3, atol=2e-3,   # bf16 matmul operands on both sides
    )

    print("KERNEL_OK")
</pallas_src>

<mosaic_0001>
module attributes {stable_mosaic.version = 11 : i64} {
  func.func @_resnet_relu_kernel(%arg0: i32, %arg1: memref<2x256xf32, #tpu.memory_space<vmem>>, %arg2: memref<32x2xf32, #tpu.memory_space<vmem>>, %arg3: memref<32x1xf32, #tpu.memory_space<vmem>>, %arg4: memref<32x32xbf16, #tpu.memory_space<vmem>>, %arg5: memref<32x1xf32, #tpu.memory_space<vmem>>, %arg6: memref<32x32xbf16, #tpu.memory_space<vmem>>, %arg7: memref<32x1xf32, #tpu.memory_space<vmem>>, %arg8: memref<32x32xbf16, #tpu.memory_space<vmem>>, %arg9: memref<32x1xf32, #tpu.memory_space<vmem>>, %arg10: memref<32x32xbf16, #tpu.memory_space<vmem>>, %arg11: memref<32x1xf32, #tpu.memory_space<vmem>>, %arg12: memref<32x32xbf16, #tpu.memory_space<vmem>>, %arg13: memref<32x1xf32, #tpu.memory_space<vmem>>, %arg14: memref<32x1xf32, #tpu.memory_space<vmem>>, %arg15: memref<1x256xf32, #tpu.memory_space<vmem>>) attributes {dimension_semantics = [#tpu.dimension_semantics<parallel>], iteration_bounds = array<i64: 8>, scalar_prefetch = 0 : i64, scratch_operands = 0 : i64, tpu.core_type = #tpu.core_type<tc>, window_params = [{transform_indices = @transform_0, window_bounds = array<i64: 2, 256>}, {pipeline_mode = #tpu.pipeline_mode<synchronous>, transform_indices = @transform_1, window_bounds = array<i64: 32, 2>}, {pipeline_mode = #tpu.pipeline_mode<synchronous>, transform_indices = @transform_2, window_bounds = array<i64: 32, 1>}, {pipeline_mode = #tpu.pipeline_mode<synchronous>, transform_indices = @transform_3, window_bounds = array<i64: 32, 32>}, {pipeline_mode = #tpu.pipeline_mode<synchronous>, transform_indices = @transform_4, window_bounds = array<i64: 32, 1>}, {pipeline_mode = #tpu.pipeline_mode<synchronous>, transform_indices = @transform_5, window_bounds = array<i64: 32, 32>}, {pipeline_mode = #tpu.pipeline_mode<synchronous>, transform_indices = @transform_6, window_bounds = array<i64: 32, 1>}, {pipeline_mode = #tpu.pipeline_mode<synchronous>, transform_indices = @transform_7, window_bounds = array<i64: 32, 32>}, {pipeline_mode = #tpu.pipeline_mode<synchronous>, transform_indices = @transform_8, window_bounds = array<i64: 32, 1>}, {pipeline_mode = #tpu.pipeline_mode<synchronous>, transform_indices = @transform_9, window_bounds = array<i64: 32, 32>}, {pipeline_mode = #tpu.pipeline_mode<synchronous>, transform_indices = @transform_10, window_bounds = array<i64: 32, 1>}, {pipeline_mode = #tpu.pipeline_mode<synchronous>, transform_indices = @transform_11, window_bounds = array<i64: 32, 32>}, {pipeline_mode = #tpu.pipeline_mode<synchronous>, transform_indices = @transform_12, window_bounds = array<i64: 32, 1>}, {pipeline_mode = #tpu.pipeline_mode<synchronous>, transform_indices = @transform_13, window_bounds = array<i64: 32, 1>}, {transform_indices = @transform_14, window_bounds = array<i64: 1, 256>}]} {
    %c0 = arith.constant 0 : index
    %c0_0 = arith.constant 0 : index
    %0 = vector.load %arg1[%c0, %c0_0] : memref<2x256xf32, #tpu.memory_space<vmem>>, vector<2x256xf32>
    %cst = arith.constant 0.000000e+00 : f32
    %1 = vector.broadcast %cst : f32 to vector<30x256xf32>
    %2 = tpu.concatenate %0, %1 in 0 : vector<2x256xf32>, vector<30x256xf32> -> vector<32x256xf32>
    %c0_1 = arith.constant 0 : index
    %c0_2 = arith.constant 0 : index
    %3 = vector.load %arg3[%c0_1, %c0_2] : memref<32x1xf32, #tpu.memory_space<vmem>>, vector<32x1xf32>
    %c0_3 = arith.constant 0 : index
    %c0_4 = arith.constant 0 : index
    %4 = vector.load %arg2[%c0_3, %c0_4] : memref<32x2xf32, #tpu.memory_space<vmem>>, vector<32x1xf32>
    %5 = vector.extract_strided_slice %0 {offsets = [0, 0], sizes = [1, 256], strides = [1, 1]} : vector<2x256xf32> to vector<1x256xf32>
    %6 = vector.broadcast %4 : vector<32x1xf32> to vector<32x256xf32>
    %7 = vector.broadcast %5 : vector<1x256xf32> to vector<32x256xf32>
    %8 = arith.mulf %6, %7 : vector<32x256xf32>
    %9 = vector.broadcast %3 : vector<32x1xf32> to vector<32x256xf32>
    %10 = arith.addf %9, %8 : vector<32x256xf32>
    %c0_5 = arith.constant 0 : index
    %c1 = arith.constant 1 : index
    %11 = vector.load %arg2[%c0_5, %c1] : memref<32x2xf32, #tpu.memory_space<vmem>>, vector<32x1xf32>
    %12 = vector.extract_strided_slice %0 {offsets = [1, 0], sizes = [1, 256], strides = [1, 1]} : vector<2x256xf32> to vector<1x256xf32>
    %13 = vector.broadcast %11 : vector<32x1xf32> to vector<32x256xf32>
    %14 = vector.broadcast %12 : vector<1x256xf32> to vector<32x256xf32>
    %15 = arith.mulf %13, %14 : vector<32x256xf32>
    %16 = arith.addf %10, %15 : vector<32x256xf32>
    %cst_6 = arith.constant 0.000000e+00 : f32
    %17 = vector.broadcast %cst_6 : f32 to vector<32x256xf32>
    %18 = arith.maximumf %16, %17 : vector<32x256xf32>
    %c0_7 = arith.constant 0 : index
    %c0_8 = arith.constant 0 : index
    %19 = vector.load %arg4[%c0_7, %c0_8] : memref<32x32xbf16, #tpu.memory_space<vmem>>, vector<32x32xbf16>
    %20 = arith.truncf %18 : vector<32x256xf32> to vector<32x256xbf16>
    %cst_9 = arith.constant dense<0.000000e+00> : vector<32x256xf32>
    %21 = tpu.matmul %19, %20, %cst_9 {dimension_numbers = #tpu.dot_dimension_numbers<[1], [0], [0], [1], [0, 0, 1, 1], [], []>} : vector<32x32xbf16>, vector<32x256xbf16>, vector<32x256xf32> -> vector<32x256xf32>
    %c0_10 = arith.constant 0 : index
    %c0_11 = arith.constant 0 : index
    %22 = vector.load %arg5[%c0_10, %c0_11] : memref<32x1xf32, #tpu.memory_space<vmem>>, vector<32x1xf32>
    %23 = vector.broadcast %22 : vector<32x1xf32> to vector<32x256xf32>
    %24 = arith.addf %21, %23 : vector<32x256xf32>
    %cst_12 = arith.constant 0.000000e+00 : f32
    %25 = vector.broadcast %cst_12 : f32 to vector<32x256xf32>
    %26 = arith.maximumf %24, %25 : vector<32x256xf32>
    %27 = arith.addf %26, %2 : vector<32x256xf32>
    %c0_13 = arith.constant 0 : index
    %c0_14 = arith.constant 0 : index
    %28 = vector.load %arg6[%c0_13, %c0_14] : memref<32x32xbf16, #tpu.memory_space<vmem>>, vector<32x32xbf16>
    %29 = arith.truncf %27 : vector<32x256xf32> to vector<32x256xbf16>
    %cst_15 = arith.constant dense<0.000000e+00> : vector<32x256xf32>
    %30 = tpu.matmul %28, %29, %cst_15 {dimension_numbers = #tpu.dot_dimension_numbers<[1], [0], [0], [1], [0, 0, 1, 1], [], []>} : vector<32x32xbf16>, vector<32x256xbf16>, vector<32x256xf32> -> vector<32x256xf32>
    %c0_16 = arith.constant 0 : index
    %c0_17 = arith.constant 0 : index
    %31 = vector.load %arg7[%c0_16, %c0_17] : memref<32x1xf32, #tpu.memory_space<vmem>>, vector<32x1xf32>
    %32 = vector.broadcast %31 : vector<32x1xf32> to vector<32x256xf32>
    %33 = arith.addf %30, %32 : vector<32x256xf32>
    %cst_18 = arith.constant 0.000000e+00 : f32
    %34 = vector.broadcast %cst_18 : f32 to vector<32x256xf32>
    %35 = arith.maximumf %33, %34 : vector<32x256xf32>
    %c0_19 = arith.constant 0 : index
    %c0_20 = arith.constant 0 : index
    %36 = vector.load %arg8[%c0_19, %c0_20] : memref<32x32xbf16, #tpu.memory_space<vmem>>, vector<32x32xbf16>
    %37 = arith.truncf %35 : vector<32x256xf32> to vector<32x256xbf16>
    %cst_21 = arith.constant dense<0.000000e+00> : vector<32x256xf32>
    %38 = tpu.matmul %36, %37, %cst_21 {dimension_numbers = #tpu.dot_dimension_numbers<[1], [0], [0], [1], [0, 0, 1, 1], [], []>} : vector<32x32xbf16>, vector<32x256xbf16>, vector<32x256xf32> -> vector<32x256xf32>
    %c0_22 = arith.constant 0 : index
    %c0_23 = arith.constant 0 : index
    %39 = vector.load %arg9[%c0_22, %c0_23] : memref<32x1xf32, #tpu.memory_space<vmem>>, vector<32x1xf32>
    %40 = vector.broadcast %39 : vector<32x1xf32> to vector<32x256xf32>
    %41 = arith.addf %38, %40 : vector<32x256xf32>
    %cst_24 = arith.constant 0.000000e+00 : f32
    %42 = vector.broadcast %cst_24 : f32 to vector<32x256xf32>
    %43 = arith.maximumf %41, %42 : vector<32x256xf32>
    %44 = arith.addf %43, %27 : vector<32x256xf32>
    %c0_25 = arith.constant 0 : index
    %c0_26 = arith.constant 0 : index
    %45 = vector.load %arg10[%c0_25, %c0_26] : memref<32x32xbf16, #tpu.memory_space<vmem>>, vector<32x32xbf16>
    %46 = arith.truncf %44 : vector<32x256xf32> to vector<32x256xbf16>
    %cst_27 = arith.constant dense<0.000000e+00> : vector<32x256xf32>
    %47 = tpu.matmul %45, %46, %cst_27 {dimension_numbers = #tpu.dot_dimension_numbers<[1], [0], [0], [1], [0, 0, 1, 1], [], []>} : vector<32x32xbf16>, vector<32x256xbf16>, vector<32x256xf32> -> vector<32x256xf32>
    %c0_28 = arith.constant 0 : index
    %c0_29 = arith.constant 0 : index
    %48 = vector.load %arg11[%c0_28, %c0_29] : memref<32x1xf32, #tpu.memory_space<vmem>>, vector<32x1xf32>
    %49 = vector.broadcast %48 : vector<32x1xf32> to vector<32x256xf32>
    %50 = arith.addf %47, %49 : vector<32x256xf32>
    %cst_30 = arith.constant 0.000000e+00 : f32
    %51 = vector.broadcast %cst_30 : f32 to vector<32x256xf32>
    %52 = arith.maximumf %50, %51 : vector<32x256xf32>
    %c0_31 = arith.constant 0 : index
    %c0_32 = arith.constant 0 : index
    %53 = vector.load %arg12[%c0_31, %c0_32] : memref<32x32xbf16, #tpu.memory_space<vmem>>, vector<32x32xbf16>
    %54 = arith.truncf %52 : vector<32x256xf32> to vector<32x256xbf16>
    %cst_33 = arith.constant dense<0.000000e+00> : vector<32x256xf32>
    %55 = tpu.matmul %53, %54, %cst_33 {dimension_numbers = #tpu.dot_dimension_numbers<[1], [0], [0], [1], [0, 0, 1, 1], [], []>} : vector<32x32xbf16>, vector<32x256xbf16>, vector<32x256xf32> -> vector<32x256xf32>
    %c0_34 = arith.constant 0 : index
    %c0_35 = arith.constant 0 : index
    %56 = vector.load %arg13[%c0_34, %c0_35] : memref<32x1xf32, #tpu.memory_space<vmem>>, vector<32x1xf32>
    %57 = vector.broadcast %56 : vector<32x1xf32> to vector<32x256xf32>
    %58 = arith.addf %55, %57 : vector<32x256xf32>
    %cst_36 = arith.constant 0.000000e+00 : f32
    %59 = vector.broadcast %cst_36 : f32 to vector<32x256xf32>
    %60 = arith.maximumf %58, %59 : vector<32x256xf32>
    %61 = arith.addf %60, %44 : vector<32x256xf32>
    %c0_37 = arith.constant 0 : index
    %c0_38 = arith.constant 0 : index
    %62 = vector.load %arg14[%c0_37, %c0_38] : memref<32x1xf32, #tpu.memory_space<vmem>>, vector<32x1xf32>
    %63 = vector.broadcast %62 : vector<32x1xf32> to vector<32x256xf32>
    %64 = arith.mulf %63, %61 : vector<32x256xf32>
    %cst_39 = arith.constant dense<0.000000e+00> : vector<256xf32>
    %65 = vector.multi_reduction <add>, %64, %cst_39 [0] : vector<32x256xf32> to vector<256xf32>
    %66 = vector.shape_cast %65 : vector<256xf32> to vector<1x256xf32>
    %c0_40 = arith.constant 0 : index
    %c0_41 = arith.constant 0 : index
    %67 = vector.load %arg15[%c0_40, %c0_41] : memref<1x256xf32, #tpu.memory_space<vmem>>, vector<1x256xf32>
    tpu.vector_store %arg15[%c0_40, %c0_41], %66 {strides = array<i32>} : memref<1x256xf32, #tpu.memory_space<vmem>>, vector<1x256xf32>,
    return
  }
  func.func @transform_0(%arg0: i32) -> (i32, i32) {
    %c0_i32 = arith.constant 0 : i32
    %c0_i32_0 = arith.constant 0 : i32
    return %c0_i32, %arg0 : i32, i32
  }
  func.func @transform_1(%arg0: i32) -> (i32, i32) {
    %c0_i32 = arith.constant 0 : i32
    %c0_i32_0 = arith.constant 0 : i32
    %c0_i32_1 = arith.constant 0 : i32
    return %c0_i32, %c0_i32_0 : i32, i32
  }
  func.func @transform_2(%arg0: i32) -> (i32, i32) {
    %c0_i32 = arith.constant 0 : i32
    %c0_i32_0 = arith.constant 0 : i32
    %c0_i32_1 = arith.constant 0 : i32
    return %c0_i32, %c0_i32_0 : i32, i32
  }
  func.func @transform_3(%arg0: i32) -> (i32, i32) {
    %c0_i32 = arith.constant 0 : i32
    %c0_i32_0 = arith.constant 0 : i32
    %c0_i32_1 = arith.constant 0 : i32
    return %c0_i32, %c0_i32_0 : i32, i32
  }
  func.func @transform_4(%arg0: i32) -> (i32, i32) {
    %c0_i32 = arith.constant 0 : i32
    %c0_i32_0 = arith.constant 0 : i32
    %c0_i32_1 = arith.constant 0 : i32
    return %c0_i32, %c0_i32_0 : i32, i32
  }
  func.func @transform_5(%arg0: i32) -> (i32, i32) {
    %c0_i32 = arith.constant 0 : i32
    %c0_i32_0 = arith.constant 0 : i32
    %c0_i32_1 = arith.constant 0 : i32
    return %c0_i32, %c0_i32_0 : i32, i32
  }
  func.func @transform_6(%arg0: i32) -> (i32, i32) {
    %c0_i32 = arith.constant 0 : i32
    %c0_i32_0 = arith.constant 0 : i32
    %c0_i32_1 = arith.constant 0 : i32
    return %c0_i32, %c0_i32_0 : i32, i32
  }
  func.func @transform_7(%arg0: i32) -> (i32, i32) {
    %c0_i32 = arith.constant 0 : i32
    %c0_i32_0 = arith.constant 0 : i32
    %c0_i32_1 = arith.constant 0 : i32
    return %c0_i32, %c0_i32_0 : i32, i32
  }
  func.func @transform_8(%arg0: i32) -> (i32, i32) {
    %c0_i32 = arith.constant 0 : i32
    %c0_i32_0 = arith.constant 0 : i32
    %c0_i32_1 = arith.constant 0 : i32
    return %c0_i32, %c0_i32_0 : i32, i32
  }
  func.func @transform_9(%arg0: i32) -> (i32, i32) {
    %c0_i32 = arith.constant 0 : i32
    %c0_i32_0 = arith.constant 0 : i32
    %c0_i32_1 = arith.constant 0 : i32
    return %c0_i32, %c0_i32_0 : i32, i32
  }
  func.func @transform_10(%arg0: i32) -> (i32, i32) {
    %c0_i32 = arith.constant 0 : i32
    %c0_i32_0 = arith.constant 0 : i32
    %c0_i32_1 = arith.constant 0 : i32
    return %c0_i32, %c0_i32_0 : i32, i32
  }
  func.func @transform_11(%arg0: i32) -> (i32, i32) {
    %c0_i32 = arith.constant 0 : i32
    %c0_i32_0 = arith.constant 0 : i32
    %c0_i32_1 = arith.constant 0 : i32
    return %c0_i32, %c0_i32_0 : i32, i32
  }
  func.func @transform_12(%arg0: i32) -> (i32, i32) {
    %c0_i32 = arith.constant 0 : i32
    %c0_i32_0 = arith.constant 0 : i32
    %c0_i32_1 = arith.constant 0 : i32
    return %c0_i32, %c0_i32_0 : i32, i32
  }
  func.func @transform_13(%arg0: i32) -> (i32, i32) {
    %c0_i32 = arith.constant 0 : i32
    %c0_i32_0 = arith.constant 0 : i32
    %c0_i32_1 = arith.constant 0 : i32
    return %c0_i32, %c0_i32_0 : i32, i32
  }
  func.func @transform_14(%arg0: i32) -> (i32, i32) {
    %c0_i32 = arith.constant 0 : i32
    %c0_i32_0 = arith.constant 0 : i32
    return %c0_i32, %arg0 : i32, i32
  }
}

</mosaic_0001>

<llo_original>
// kernel: resnet_relu_base_forward.1
$region0: #{resnet_relu_base_forward.1}
  #allocation0 [shape = 'u32[]', space=smem, size = 0x4, offset = 0x4, fixed_abs, tag = 'smem constant byte address 0x4 - core index']
  #allocation1 [shape = 'u32[144,128]{1,0:T(1,128)}', space=vmem, size = 0x12000, scoped, tag = 'internal scratch']
  %s0 = inlined_call_operand.vmem [shape: f32[2,2048], index: 0, kind: input, shape index: {}]
  %s1 = inlined_call_operand.vmem [shape: f32[32,2], index: 1, kind: input, shape index: {}]
  %s2 = inlined_call_operand.vmem [shape: f32[32,1], index: 2, kind: input, shape index: {}]
  %s3 = inlined_call_operand.vmem [shape: bf16[32,32], index: 3, kind: input, shape index: {}]
  %s4 = inlined_call_operand.vmem [shape: f32[32,1], index: 4, kind: input, shape index: {}]
  %s5 = inlined_call_operand.vmem [shape: bf16[32,32], index: 5, kind: input, shape index: {}]
  %s6 = inlined_call_operand.vmem [shape: f32[32,1], index: 6, kind: input, shape index: {}]
  %s7 = inlined_call_operand.vmem [shape: bf16[32,32], index: 7, kind: input, shape index: {}]
  %s8 = inlined_call_operand.vmem [shape: f32[32,1], index: 8, kind: input, shape index: {}]
  %s9 = inlined_call_operand.vmem [shape: bf16[32,32], index: 9, kind: input, shape index: {}]
  %s10 = inlined_call_operand.vmem [shape: f32[32,1], index: 10, kind: input, shape index: {}]
  %s11 = inlined_call_operand.vmem [shape: bf16[32,32], index: 11, kind: input, shape index: {}]
  %s12 = inlined_call_operand.vmem [shape: f32[32,1], index: 12, kind: input, shape index: {}]
  %s13 = inlined_call_operand.vmem [shape: f32[32,1], index: 13, kind: input, shape index: {}]
  %s14 = inlined_call_operand.hbm [shape: f32[1,2048], index: 14, kind: output, shape index: {}]
  %s15 = sld [smem:[#allocation0]]
  $region89: #{resnet_relu_base_forward.1} parent=0
    _
  %s17 = ssub.s32 1, %s15
  %s18 = scalar_select 0, %s17, %s15
  $region1: #{resnet_relu_base_forward.1} parent=0
    #allocation2 [shape = 'u8[2048]{0}', space=vmem, size = 0x800, scoped, tag = 'output window, operand 0']
    #allocation3 [shape = 's32[2]{0}', space=sflag, size = 0x8, scoped, tag = 'scoped memory for resnet_relu_base_forward.1']
    %19 = vsyncpa [#allocation3], 0
    %s20 = scalar_lea.sflag [#allocation3], 1
    %21 = vsyncpa %s20, 0
    loop: start=0, step=1, limit=10
    $region2: #{resnet_relu_base_forward.1} parent=1 // loop_pre_header
      _
    $region3: #{resnet_relu_base_forward.1} parent=1 // loop_header
      %s23 = sphi 0, %s27
      %p24 = scmp.ge.s32.totalorder %s23, 10
      %s33 = sphi 0, %s35
      %s36 = sphi 0, %s33
      %s37 = sphi 0, %s36
      %s53 = sphi 0, %s37
      %s57 = sphi 0, %s57
      %s59 = sphi 0, %s57
      %s60 = sphi 0, %s59
      %s74 = sphi 0, %s60
      %s78 = sphi 0, %s78
      %s80 = sphi 0, %s78
      %s81 = sphi 0, %s80
      %s95 = sphi 0, %s81
      %s99 = sphi 0, %s99
      %s101 = sphi 0, %s99
      %s102 = sphi 0, %s101
      %s116 = sphi 0, %s102
      %s120 = sphi 0, %s120
      %s122 = sphi 0, %s120
      %s123 = sphi 0, %s122
      %s137 = sphi 0, %s123
      %s141 = sphi 0, %s141
      %s143 = sphi 0, %s141
      %s144 = sphi 0, %s143
      %s158 = sphi 0, %s144
      %s162 = sphi 0, %s162
      %s164 = sphi 0, %s162
      %s165 = sphi 0, %s164
      %s179 = sphi 0, %s165
      %s183 = sphi 0, %s183
      %s185 = sphi 0, %s183
      %s186 = sphi 0, %s185
      %s200 = sphi 0, %s186
      %s204 = sphi 0, %s204
      %s206 = sphi 0, %s204
      %s207 = sphi 0, %s206
      %s221 = sphi 0, %s207
      %s225 = sphi 0, %s225
      %s227 = sphi 0, %s225
      %s228 = sphi 0, %s227
      %s242 = sphi 0, %s228
      %s246 = sphi 0, %s246
      %s248 = sphi 0, %s246
      %s249 = sphi 0, %s248
      %s263 = sphi 0, %s249
      %s267 = sphi 0, %s267
      %s269 = sphi 0, %s267
      %s270 = sphi 0, %s269
      %s284 = sphi 0, %s270
      %s288 = sphi 0, %s288
      %s290 = sphi 0, %s288
      %s291 = sphi 0, %s290
      %s305 = sphi 0, %s291
      %s309 = sphi 0, %s309
      %s311 = sphi 0, %s309
      %s312 = sphi 0, %s311
      %s326 = sphi 0, %s312
      %s332 = sphi 0, %s334
      %s335 = sphi 0, %s332
      %s336 = sphi 0, %s335
      %s352 = sphi 0, %s336
    $region4: #{resnet_relu_base_forward.1} parent=1 // loop_header_branch
      %26 = sbr.rel (%p24) target = $region8
    $region5: #{resnet_relu_base_forward.1} parent=1 // loop_body
      %s28 = ssub.s32 %s23, 1
      %s29 = ssub.s32 %s23, 2
      %s30 = sadd.s32 %s23, 1
      %s31 = ssub.s32 %s23, %s30
      %p32 = scmp.eq.s32.totalorder %s31, 0
      %s34 = sadd.s32 %s33, 1
      %s35 = scalar_select %p32, %s33, %s34
      %p38 = pneg %p32
      %p39 = scmp.eq.s32.totalorder %s23, 7
      %p40 = por %p38, %p39
      %p41 = scmp.ne.s32.totalorder %s33, %s36
      %p42 = scmp.eq.s32.totalorder %s23, 0
      %p43 = por %p41, %p42
      %p44 = scmp.ne.s32.totalorder %s33, %s36
      %p45 = scmp.eq.s32.totalorder %s28, 7
      %p46 = por %p44, %p45
      %p47 = scmp.ne.s32.totalorder %s36, %s37
      %p48 = scmp.eq.s32.totalorder %s28, 0
      %p49 = por %p47, %p48
      %p50 = scmp.ne.s32.totalorder %s36, %s37
      %p51 = scmp.eq.s32.totalorder %s29, 7
      %p52 = por %p50, %p51
      %p54 = scmp.ne.s32.totalorder %s37, %s53
      %p55 = scmp.eq.s32.totalorder %s29, 0
      %p56 = por %p54, %p55
      %s58 = sadd.s32 %s57, 1
      %p61 = scmp.eq.s32.totalorder %s23, 7
      %p62 = scmp.ne.s32.totalorder %s57, %s59
      %p63 = scmp.eq.s32.totalorder %s23, 0
      %p64 = por %p62, %p63
      %p65 = scmp.ne.s32.totalorder %s57, %s59
      %p66 = scmp.eq.s32.totalorder %s28, 7
      %p67 = por %p65, %p66
      %p68 = scmp.ne.s32.totalorder %s59, %s60
      %p69 = scmp.eq.s32.totalorder %s28, 0
      %p70 = por %p68, %p69
      %p71 = scmp.ne.s32.totalorder %s59, %s60
      %p72 = scmp.eq.s32.totalorder %s29, 7
      %p73 = por %p71, %p72
      %p75 = scmp.ne.s32.totalorder %s60, %s74
      %p76 = scmp.eq.s32.totalorder %s29, 0
      %p77 = por %p75, %p76
      %s79 = sadd.s32 %s78, 1
      %p82 = scmp.eq.s32.totalorder %s23, 7
      %p83 = scmp.ne.s32.totalorder %s78, %s80
      %p84 = scmp.eq.s32.totalorder %s23, 0
      %p85 = por %p83, %p84
      %p86 = scmp.ne.s32.totalorder %s78, %s80
      %p87 = scmp.eq.s32.totalorder %s28, 7
      %p88 = por %p86, %p87
      %p89 = scmp.ne.s32.totalorder %s80, %s81
      %p90 = scmp.eq.s32.totalorder %s28, 0
      %p91 = por %p89, %p90
      %p92 = scmp.ne.s32.totalorder %s80, %s81
      %p93 = scmp.eq.s32.totalorder %s29, 7
      %p94 = por %p92, %p93
      %p96 = scmp.ne.s32.totalorder %s81, %s95
      %p97 = scmp.eq.s32.totalorder %s29, 0
      %p98 = por %p96, %p97
      %s100 = sadd.s32 %s99, 1
      %p103 = scmp.eq.s32.totalorder %s23, 7
      %p104 = scmp.ne.s32.totalorder %s99, %s101
      %p105 = scmp.eq.s32.totalorder %s23, 0
      %p106 = por %p104, %p105
      %p107 = scmp.ne.s32.totalorder %s99, %s101
      %p108 = scmp.eq.s32.totalorder %s28, 7
      %p109 = por %p107, %p108
      %p110 = scmp.ne.s32.totalorder %s101, %s102
      %p111 = scmp.eq.s32.totalorder %s28, 0
      %p112 = por %p110, %p111
      %p113 = scmp.ne.s32.totalorder %s101, %s102
      %p114 = scmp.eq.s32.totalorder %s29, 7
      %p115 = por %p113, %p114
      %p117 = scmp.ne.s32.totalorder %s102, %s116
      %p118 = scmp.eq.s32.totalorder %s29, 0
      %p119 = por %p117, %p118
      %s121 = sadd.s32 %s120, 1
      %p124 = scmp.eq.s32.totalorder %s23, 7
      %p125 = scmp.ne.s32.totalorder %s120, %s122
      %p126 = scmp.eq.s32.totalorder %s23, 0
      %p127 = por %p125, %p126
      %p128 = scmp.ne.s32.totalorder %s120, %s122
      %p129 = scmp.eq.s32.totalorder %s28, 7
      %p130 = por %p128, %p129
      %p131 = scmp.ne.s32.totalorder %s122, %s123
      %p132 = scmp.eq.s32.totalorder %s28, 0
      %p133 = por %p131, %p132
      %p134 = scmp.ne.s32.totalorder %s122, %s123
      %p135 = scmp.eq.s32.totalorder %s29, 7
      %p136 = por %p134, %p135
      %p138 = scmp.ne.s32.totalorder %s123, %s137
      %p139 = scmp.eq.s32.totalorder %s29, 0
      %p140 = por %p138, %p139
      %s142 = sadd.s32 %s141, 1
      %p145 = scmp.eq.s32.totalorder %s23, 7
      %p146 = scmp.ne.s32.totalorder %s141, %s143
      %p147 = scmp.eq.s32.totalorder %s23, 0
      %p148 = por %p146, %p147
      %p149 = scmp.ne.s32.totalorder %s141, %s143
      %p150 = scmp.eq.s32.totalorder %s28, 7
      %p151 = por %p149, %p150
      %p152 = scmp.ne.s32.totalorder %s143, %s144
      %p153 = scmp.eq.s32.totalorder %s28, 0
      %p154 = por %p152, %p153
      %p155 = scmp.ne.s32.totalorder %s143, %s144
      %p156 = scmp.eq.s32.totalorder %s29, 7
      %p157 = por %p155, %p156
      %p159 = scmp.ne.s32.totalorder %s144, %s158
      %p160 = scmp.eq.s32.totalorder %s29, 0
      %p161 = por %p159, %p160
      %s163 = sadd.s32 %s162, 1
      %p166 = scmp.eq.s32.totalorder %s23, 7
      %p167 = scmp.ne.s32.totalorder %s162, %s164
      %p168 = scmp.eq.s32.totalorder %s23, 0
      %p169 = por %p167, %p168
      %p170 = scmp.ne.s32.totalorder %s162, %s164
      %p171 = scmp.eq.s32.totalorder %s28, 7
      %p172 = por %p170, %p171
      %p173 = scmp.ne.s32.totalorder %s164, %s165
      %p174 = scmp.eq.s32.totalorder %s28, 0
      %p175 = por %p173, %p174
      %p176 = scmp.ne.s32.totalorder %s164, %s165
      %p177 = scmp.eq.s32.totalorder %s29, 7
      %p178 = por %p176, %p177
      %p180 = scmp.ne.s32.totalorder %s165, %s179
      %p181 = scmp.eq.s32.totalorder %s29, 0
      %p182 = por %p180, %p181
      %s184 = sadd.s32 %s183, 1
      %p187 = scmp.eq.s32.totalorder %s23, 7
      %p188 = scmp.ne.s32.totalorder %s183, %s185
      %p189 = scmp.eq.s32.totalorder %s23, 0
      %p190 = por %p188, %p189
      %p191 = scmp.ne.s32.totalorder %s183, %s185
      %p192 = scmp.eq.s32.totalorder %s28, 7
      %p193 = por %p191, %p192
      %p194 = scmp.ne.s32.totalorder %s185, %s186
      %p195 = scmp.eq.s32.totalorder %s28, 0
      %p196 = por %p194, %p195
      %p197 = scmp.ne.s32.totalorder %s185, %s186
      %p198 = scmp.eq.s32.totalorder %s29, 7
      %p199 = por %p197, %p198
      %p201 = scmp.ne.s32.totalorder %s186, %s200
      %p202 = scmp.eq.s32.totalorder %s29, 0
      %p203 = por %p201, %p202
      %s205 = sadd.s32 %s204, 1
      %p208 = scmp.eq.s32.totalorder %s23, 7
      %p209 = scmp.ne.s32.totalorder %s204, %s206
      %p210 = scmp.eq.s32.totalorder %s23, 0
      %p211 = por %p209, %p210
      %p212 = scmp.ne.s32.totalorder %s204, %s206
      %p213 = scmp.eq.s32.totalorder %s28, 7
      %p214 = por %p212, %p213
      %p215 = scmp.ne.s32.totalorder %s206, %s207
      %p216 = scmp.eq.s32.totalorder %s28, 0
      %p217 = por %p215, %p216
      %p218 = scmp.ne.s32.totalorder %s206, %s207
      %p219 = scmp.eq.s32.totalorder %s29, 7
      %p220 = por %p218, %p219
      %p222 = scmp.ne.s32.totalorder %s207, %s221
      %p223 = scmp.eq.s32.totalorder %s29, 0
      %p224 = por %p222, %p223
      %s226 = sadd.s32 %s225, 1
      %p229 = scmp.eq.s32.totalorder %s23, 7
      %p230 = scmp.ne.s32.totalorder %s225, %s227
      %p231 = scmp.eq.s32.totalorder %s23, 0
      %p232 = por %p230, %p231
      %p233 = scmp.ne.s32.totalorder %s225, %s227
      %p234 = scmp.eq.s32.totalorder %s28, 7
      %p235 = por %p233, %p234
      %p236 = scmp.ne.s32.totalorder %s227, %s228
      %p237 = scmp.eq.s32.totalorder %s28, 0
      %p238 = por %p236, %p237
      %p239 = scmp.ne.s32.totalorder %s227, %s228
      %p240 = scmp.eq.s32.totalorder %s29, 7
      %p241 = por %p239, %p240
      %p243 = scmp.ne.s32.totalorder %s228, %s242
      %p244 = scmp.eq.s32.totalorder %s29, 0
      %p245 = por %p243, %p244
      %s247 = sadd.s32 %s246, 1
      %p250 = scmp.eq.s32.totalorder %s23, 7
      %p251 = scmp.ne.s32.totalorder %s246, %s248
      %p252 = scmp.eq.s32.totalorder %s23, 0
      %p253 = por %p251, %p252
      %p254 = scmp.ne.s32.totalorder %s246, %s248
      %p255 = scmp.eq.s32.totalorder %s28, 7
      %p256 = por %p254, %p255
      %p257 = scmp.ne.s32.totalorder %s248, %s249
      %p258 = scmp.eq.s32.totalorder %s28, 0
      %p259 = por %p257, %p258
      %p260 = scmp.ne.s32.totalorder %s248, %s249
      %p261 = scmp.eq.s32.totalorder %s29, 7
      %p262 = por %p260, %p261
      %p264 = scmp.ne.s32.totalorder %s249, %s263
      %p265 = scmp.eq.s32.totalorder %s29, 0
      %p266 = por %p264, %p265
      %s268 = sadd.s32 %s267, 1
      %p271 = scmp.eq.s32.totalorder %s23, 7
      %p272 = scmp.ne.s32.totalorder %s267, %s269
      %p273 = scmp.eq.s32.totalorder %s23, 0
      %p274 = por %p272, %p273
      %p275 = scmp.ne.s32.totalorder %s267, %s269
      %p276 = scmp.eq.s32.totalorder %s28, 7
      %p277 = por %p275, %p276
      %p278 = scmp.ne.s32.totalorder %s269, %s270
      %p279 = scmp.eq.s32.totalorder %s28, 0
      %p280 = por %p278, %p279
      %p281 = scmp.ne.s32.totalorder %s269, %s270
      %p282 = scmp.eq.s32.totalorder %s29, 7
      %p283 = por %p281, %p282
      %p285 = scmp.ne.s32.totalorder %s270, %s284
      %p286 = scmp.eq.s32.totalorder %s29, 0
      %p287 = por %p285, %p286
      %s289 = sadd.s32 %s288, 1
      %p292 = scmp.eq.s32.totalorder %s23, 7
      %p293 = scmp.ne.s32.totalorder %s288, %s290
      %p294 = scmp.eq.s32.totalorder %s23, 0
      %p295 = por %p293, %p294
      %p296 = scmp.ne.s32.totalorder %s288, %s290
      %p297 = scmp.eq.s32.totalorder %s28, 7
      %p298 = por %p296, %p297
      %p299 = scmp.ne.s32.totalorder %s290, %s291
      %p300 = scmp.eq.s32.totalorder %s28, 0
      %p301 = por %p299, %p300
      %p302 = scmp.ne.s32.totalorder %s290, %s291
      %p303 = scmp.eq.s32.totalorder %s29, 7
      %p304 = por %p302, %p303
      %p306 = scmp.ne.s32.totalorder %s291, %s305
      %p307 = scmp.eq.s32.totalorder %s29, 0
      %p308 = por %p306, %p307
      %s310 = sadd.s32 %s309, 1
      %p313 = scmp.eq.s32.totalorder %s23, 7
      %p314 = scmp.ne.s32.totalorder %s309, %s311
      %p315 = scmp.eq.s32.totalorder %s23, 0
      %p316 = por %p314, %p315
      %p317 = scmp.ne.s32.totalorder %s309, %s311
      %p318 = scmp.eq.s32.totalorder %s28, 7
      %p319 = por %p317, %p318
      %p320 = scmp.ne.s32.totalorder %s311, %s312
      %p321 = scmp.eq.s32.totalorder %s28, 0
      %p322 = por %p320, %p321
      %p323 = scmp.ne.s32.totalorder %s311, %s312
      %p324 = scmp.eq.s32.totalorder %s29, 7
      %p325 = por %p323, %p324
      %p327 = scmp.ne.s32.totalorder %s312, %s326
      %p328 = scmp.eq.s32.totalorder %s29, 0
      %p329 = por %p327, %p328
      %s330 = ssub.s32 %s23, %s30
      %p331 = scmp.eq.s32.totalorder %s330, 0
      %s333 = sadd.s32 %s332, 1
      %s334 = scalar_select %p331, %s332, %s333
      %p337 = pneg %p331
      %p338 = scmp.eq.s32.totalorder %s23, 7
      %p339 = por %p337, %p338
      %p340 = scmp.ne.s32.totalorder %s332, %s335
      %p341 = scmp.eq.s32.totalorder %s23, 0
      %p342 = por %p340, %p341
      %p343 = scmp.ne.s32.totalorder %s332, %s335
      %p344 = scmp.eq.s32.totalorder %s28, 7
      %p345 = por %p343, %p344
      %p346 = scmp.ne.s32.totalorder %s335, %s336
      %p347 = scmp.eq.s32.totalorder %s28, 0
      %p348 = por %p346, %p347
      %p349 = scmp.ne.s32.totalorder %s335, %s336
      %p350 = scmp.eq.s32.totalorder %s29, 7
      %p351 = por %p349, %p350
      %p353 = scmp.ne.s32.totalorder %s336, %s352
      %p354 = scmp.eq.s32.totalorder %s29, 0
      %p355 = por %p353, %p354
      %p356 = scmp.le.s32.totalorder 1, %s23
      %p357 = scmp.lt.s32.totalorder %s23, 9
      %p358 = pnand %p356, %p357
      %p359 = pneg %p358
      // Predicated region
      $region9: #{resnet_relu_base_forward.1} parent=5 // pred_check
        _
      $region10: #{resnet_relu_base_forward.1} parent=5 // pred_check_branch
        %361 = sbr.rel (%p358) target = $region12
      $region11: #{resnet_relu_base_forward.1} parent=5 // pred_region
        %s362 = ssub.s32 %s23, 1
        // Predicated region
        $region13: #{resnet_relu_base_forward.1} parent=11 // pred_check
          %p363 = pneg %p70
        $region14: #{resnet_relu_base_forward.1} parent=11 // pred_check_branch
          %365 = sbr.rel (%p363) target = $region16
        $region15: #{resnet_relu_base_forward.1} parent=11 // pred_region
          _
        $region16: #{resnet_relu_base_forward.1} parent=11 // pred_fallthru
          _
        // Predicated region
        $region17: #{resnet_relu_base_forward.1} parent=11 // pred_check
          %p366 = pneg %p91
        $region18: #{resnet_relu_base_forward.1} parent=11 // pred_check_branch
          %368 = sbr.rel (%p366) target = $region20
        $region19: #{resnet_relu_base_forward.1} parent=11 // pred_region
          _
        $region20: #{resnet_relu_base_forward.1} parent=11 // pred_fallthru
          _
        // Predicated region
        $region21: #{resnet_relu_base_forward.1} parent=11 // pred_check
          %p369 = pneg %p112
        $region22: #{resnet_relu_base_forward.1} parent=11 // pred_check_branch
          %371 = sbr.rel (%p369) target = $region24
        $region23: #{resnet_relu_base_forward.1} parent=11 // pred_region
          _
        $region24: #{resnet_relu_base_forward.1} parent=11 // pred_fallthru
          _
        // Predicated region
        $region25: #{resnet_relu_base_forward.1} parent=11 // pred_check
          %p372 = pneg %p133
        $region26: #{resnet_relu_base_forward.1} parent=11 // pred_check_branch
          %374 = sbr.rel (%p372) target = $region28
        $region27: #{resnet_relu_base_forward.1} parent=11 // pred_region
          _
        $region28: #{resnet_relu_base_forward.1} parent=11 // pred_fallthru
          _
        // Predicated region
        $region29: #{resnet_relu_base_forward.1} parent=11 // pred_check
          %p375 = pneg %p154
        $region30: #{resnet_relu_base_forward.1} parent=11 // pred_check_branch
          %377 = sbr.rel (%p375) target = $region32
        $region31: #{resnet_relu_base_forward.1} parent=11 // pred_region
          _
        $region32: #{resnet_relu_base_forward.1} parent=11 // pred_fallthru
          _
        // Predicated region
        $region33: #{resnet_relu_base_forward.1} parent=11 // pred_check
          %p378 = pneg %p175
        $region34: #{resnet_relu_base_forward.1} parent=11 // pred_check_branch
          %380 = sbr.rel (%p378) target = $region36
        $region35: #{resnet_relu_base_forward.1} parent=11 // pred_region
          _
        $region36: #{resnet_relu_base_forward.1} parent=11 // pred_fallthru
          _
        // Predicated region
        $region37: #{resnet_relu_base_forward.1} parent=11 // pred_check
          %p381 = pneg %p196
        $region38: #{resnet_relu_base_forward.1} parent=11 // pred_check_branch
          %383 = sbr.rel (%p381) target = $region40
        $region39: #{resnet_relu_base_forward.1} parent=11 // pred_region
          _
        $region40: #{resnet_relu_base_forward.1} parent=11 // pred_fallthru
          _
        // Predicated region
        $region41: #{resnet_relu_base_forward.1} parent=11 // pred_check
          %p384 = pneg %p217
        $region42: #{resnet_relu_base_forward.1} parent=11 // pred_check_branch
          %386 = sbr.rel (%p384) target = $region44
        $region43: #{resnet_relu_base_forward.1} parent=11 // pred_region
          _
        $region44: #{resnet_relu_base_forward.1} parent=11 // pred_fallthru
          _
        // Predicated region
        $region45: #{resnet_relu_base_forward.1} parent=11 // pred_check
          %p387 = pneg %p238
        $region46: #{resnet_relu_base_forward.1} parent=11 // pred_check_branch
          %389 = sbr.rel (%p387) target = $region48
        $region47: #{resnet_relu_base_forward.1} parent=11 // pred_region
          _
        $region48: #{resnet_relu_base_forward.1} parent=11 // pred_fallthru
          _
        // Predicated region
        $region49: #{resnet_relu_base_forward.1} parent=11 // pred_check
          %p390 = pneg %p259
        $region50: #{resnet_relu_base_forward.1} parent=11 // pred_check_branch
          %392 = sbr.rel (%p390) target = $region52
        $region51: #{resnet_relu_base_forward.1} parent=11 // pred_region
          _
        $region52: #{resnet_relu_base_forward.1} parent=11 // pred_fallthru
          _
        // Predicated region
        $region53: #{resnet_relu_base_forward.1} parent=11 // pred_check
          %p393 = pneg %p280
        $region54: #{resnet_relu_base_forward.1} parent=11 // pred_check_branch
          %395 = sbr.rel (%p393) target = $region56
        $region55: #{resnet_relu_base_forward.1} parent=11 // pred_region
          _
        $region56: #{resnet_relu_base_forward.1} parent=11 // pred_fallthru
          _
        // Predicated region
        $region57: #{resnet_relu_base_forward.1} parent=11 // pred_check
          %p396 = pneg %p301
        $region58: #{resnet_relu_base_forward.1} parent=11 // pred_check_branch
          %398 = sbr.rel (%p396) target = $region60
        $region59: #{resnet_relu_base_forward.1} parent=11 // pred_region
          _
        $region60: #{resnet_relu_base_forward.1} parent=11 // pred_fallthru
          _
        // Predicated region
        $region61: #{resnet_relu_base_forward.1} parent=11 // pred_check
          %p399 = pneg %p322
        $region62: #{resnet_relu_base_forward.1} parent=11 // pred_check_branch
          %401 = sbr.rel (%p399) target = $region64
        $region63: #{resnet_relu_base_forward.1} parent=11 // pred_region
          _
        $region64: #{resnet_relu_base_forward.1} parent=11 // pred_fallthru
          _
      $region12: #{resnet_relu_base_forward.1} parent=5 // pred_fallthru
        _
      %p402 = scmp.lt.s32.totalorder %s23, 8
      // Predicated region
      $region65: #{resnet_relu_base_forward.1} parent=5 // pred_check
        %p403 = pneg %p402
      $region66: #{resnet_relu_base_forward.1} parent=5 // pred_check_branch
        %405 = sbr.rel (%p403) target = $region68
      $region67: #{resnet_relu_base_forward.1} parent=5 // pred_region
        // Predicated region
        $region69: #{resnet_relu_base_forward.1} parent=67 // pred_check
          %p406 = pneg %p43
        $region70: #{resnet_relu_base_forward.1} parent=67 // pred_check_branch
          %408 = sbr.rel (%p406) target = $region72
        $region71: #{resnet_relu_base_forward.1} parent=67 // pred_region
          %s409 = smul.u32 2, %s23
          %p410 = scmp.lt.s32.totalorder %s409, 15
          %s411 = scalar_select %p410, %s409, 15
          %s412 = smul.addr %s411, 2
          %s413 = scalar_lea.vmem %s0, %s412
          %s414 = smul.u32 2, %s23
        $region72: #{resnet_relu_base_forward.1} parent=67 // pred_fallthru
          _
      $region68: #{resnet_relu_base_forward.1} parent=5 // pred_fallthru
        _
      %p415 = scmp.le.s32.totalorder 1, %s23
      %p416 = scmp.lt.s32.totalorder %s23, 9
      %p417 = pnand %p415, %p416
      %p418 = pneg %p417
      // Predicated region
      $region73: #{resnet_relu_base_forward.1} parent=5 // pred_check
        _
      $region74: #{resnet_relu_base_forward.1} parent=5 // pred_check_branch
        %420 = sbr.rel (%p417) target = $region76
      $region75: #{resnet_relu_base_forward.1} parent=5 // pred_region
        %s421 = ssub.s32 %s23, 1
        %s422 = smul.u32 2, %s28
        %p423 = scmp.lt.s32.totalorder %s422, 15
        %s424 = scalar_select %p423, %s422, 15
        %s425 = smul.addr %s424, 2
        %s426 = scalar_lea.vmem %s0, %s425
        %p427 = pneg %p49
        %p428 = pneg %p46
        %p429 = pneg %p70
        %p430 = pneg %p67
        %p431 = pneg %p91
        %p432 = pneg %p88
        %p433 = pneg %p112
        %p434 = pneg %p109
        %p435 = pneg %p133
        %p436 = pneg %p130
        %p437 = pneg %p154
        %p438 = pneg %p151
        %p439 = pneg %p175
        %p440 = pneg %p172
        %p441 = pneg %p196
        %p442 = pneg %p193
        %p443 = pneg %p217
        %p444 = pneg %p214
        %p445 = pneg %p238
        %p446 = pneg %p235
        %p447 = pneg %p259
        %p448 = pneg %p256
        %p449 = pneg %p280
        %p450 = pneg %p277
        %p451 = pneg %p301
        %p452 = pneg %p298
        %p453 = pneg %p322
        %p454 = pneg %p319
        %p455 = pneg %p348
        %p456 = pneg %p345
        %s457 = sand.u32 %s335, 1
        %s458 = scalar_lea.sflag [#allocation3], %s457
        %s459 = sand.u32 %s335, 1
        %s460 = smul.addr %s459, 2
        %s461 = scalar_lea.vmem [#allocation2], %s460
        %s462 = smul.u32 2, %s28
        %p463 = scmp.lt.s32.totalorder %s462, 15
        %s464 = scalar_select %p463, %s462, 15
        %s465 = smul.addr %s464, 2
        %s466 = scalar_lea.vmem %s0, %s465
        %s467 = smul.u32 2, %s28
        %s468 = smul.u32 2, %s28
        %v470 = vld [vmem:[%s466] sm:$0xf]
        %v473 = vunpack.c.l.s4 1983009808
        %v474 = vunpack.c.0.s8 %v473
        %v475 = vlaneseq
        %v476 = vshrl.u32 %v475, 7
        %v477 = vsub.s32 %v474, %v476
        %v478 = vrot.slane %v470, %v477
        %v479 = vcombine.high %v478, %v478
        %vm482 = vcmask 1041408
        %v483 = vsel %vm482, %v478, 0.0
        %v484 = vsel %vm482, %v479, 0.0
        %v485 = vld [vmem:[%s2] sm:$0xff]
        %v486 = vld [vmem:[%s2 + $0x8] sm:$0xff]
        %v487 = vld [vmem:[%s2 + $0x10] sm:$0xff]
        %v488 = vld [vmem:[%s2 + $0x18] sm:$0xff]
        %v489 = vld [vmem:[%s1] sm:$0xff]
        %v490 = vld [vmem:[%s1 + $0x8] sm:$0xff]
        %v491 = vld [vmem:[%s1 + $0x10] sm:$0xff]
        %v492 = vld [vmem:[%s1 + $0x18] sm:$0xff]
        %494 = vset.pattern.permute.xlu0 0
        %495 = vperm.xlu0 %494, %v489
        %v496 = vpop.permute.xlu0 %495
        %499 = vset.pattern.permute.xlu0 0
        %500 = vperm.xlu0 %499, %v490
        %v501 = vpop.permute.xlu0 %500
        %504 = vset.pattern.permute.xlu0 0
        %505 = vperm.xlu0 %504, %v491
        %v506 = vpop.permute.xlu0 %505
        %509 = vset.pattern.permute.xlu0 0
        %510 = vperm.xlu0 %509, %v492
        %v511 = vpop.permute.xlu0 %510
        %v513 = vlaneseq
        %v514 = vshrl.u32 %v513, 7
        %v515 = vsub.s32 0, %v514
        %v516 = vrot.slane %v470, %v515
        %v517 = vlaneseq
        %v518 = vshrl.u32 %v517, 7
        %v519 = vsub.s32 2, %v518
        %v520 = vrot.slane %v470, %v519
        %v523 = vlaneseq
        %v524 = vshrl.u32 %v523, 7
        %v525 = vsub.s32 0, %v524
        %v526 = vrot.slane %v516, %v525
        %v527 = vlaneseq
        %v528 = vshrl.u32 %v527, 7
        %v529 = vsub.s32 0, %v528
        %v530 = vrot.slane %v520, %v529
        %v531 = vmul.f32 %v496, %v526
        %v532 = vmul.f32 %v496, %v530
        %v533 = vmul.f32 %v501, %v526
        %v534 = vmul.f32 %v501, %v530
        %v535 = vmul.f32 %v506, %v526
        %v536 = vmul.f32 %v506, %v530
        %v537 = vmul.f32 %v511, %v526
        %v538 = vmul.f32 %v511, %v530
        %540 = vset.pattern.permute.xlu0 0
        %541 = vperm.xlu0 %540, %v485
        %v542 = vpop.permute.xlu0 %541
        %545 = vset.pattern.permute.xlu0 0
        %546 = vperm.xlu0 %545, %v486
        %v547 = vpop.permute.xlu0 %546
        %550 = vset.pattern.permute.xlu0 0
        %551 = vperm.xlu0 %550, %v487
        %v552 = vpop.permute.xlu0 %551
        %555 = vset.pattern.permute.xlu0 0
        %556 = vperm.xlu0 %555, %v488
        %v557 = vpop.permute.xlu0 %556
        %v559 = vadd.f32 %v542, %v531
        %v560 = vadd.f32 %v542, %v532
        %v561 = vadd.f32 %v547, %v533
        %v562 = vadd.f32 %v547, %v534
        %v563 = vadd.f32 %v552, %v535
        %v564 = vadd.f32 %v552, %v536
        %v565 = vadd.f32 %v557, %v537
        %v566 = vadd.f32 %v557, %v538
        %567 = vset.pattern.permute.xlu0 1
        %568 = vperm.xlu0 %567, %v489
        %v569 = vpop.permute.xlu0 %568
        %571 = vset.pattern.permute.xlu0 1
        %572 = vperm.xlu0 %571, %v490
        %v573 = vpop.permute.xlu0 %572
        %575 = vset.pattern.permute.xlu0 1
        %576 = vperm.xlu0 %575, %v491
        %v577 = vpop.permute.xlu0 %576
        %579 = vset.pattern.permute.xlu0 1
        %580 = vperm.xlu0 %579, %v492
        %v581 = vpop.permute.xlu0 %580
        %v583 = vlaneseq
        %v584 = vshrl.u32 %v583, 7
        %v585 = vsub.s32 1, %v584
        %v586 = vrot.slane %v470, %v585
        %v587 = vlaneseq
        %v588 = vshrl.u32 %v587, 7
        %v589 = vsub.s32 3, %v588
        %v590 = vrot.slane %v470, %v589
        %v593 = vlaneseq
        %v594 = vshrl.u32 %v593, 7
        %v595 = vsub.s32 1, %v594
        %v596 = vrot.slane %v586, %v595
        %v597 = vlaneseq
        %v598 = vshrl.u32 %v597, 7
        %v599 = vsub.s32 1, %v598
        %v600 = vrot.slane %v590, %v599
        %v601 = vmul.f32 %v569, %v596
        %v602 = vmul.f32 %v569, %v600
        %v603 = vmul.f32 %v573, %v596
        %v604 = vmul.f32 %v573, %v600
        %v605 = vmul.f32 %v577, %v596
        %v606 = vmul.f32 %v577, %v600
        %v607 = vmul.f32 %v581, %v596
        %v608 = vmul.f32 %v581, %v600
        %v609 = vadd.f32 %v559, %v601
        %v610 = vadd.f32 %v560, %v602
        %v611 = vadd.f32 %v561, %v603
        %v612 = vadd.f32 %v562, %v604
        %v613 = vadd.f32 %v563, %v605
        %v614 = vadd.f32 %v564, %v606
        %v615 = vadd.f32 %v565, %v607
        %v616 = vadd.f32 %v566, %v608
        %v617 = vmax.f32 %v609, 0.0
        %v618 = vmax.f32 %v610, 0.0
        %v619 = vmax.f32 %v611, 0.0
        %v620 = vmax.f32 %v612, 0.0
        %v621 = vmax.f32 %v613, 0.0
        %v622 = vmax.f32 %v614, 0.0
        %v623 = vmax.f32 %v615, 0.0
        %v624 = vmax.f32 %v616, 0.0
        %v625 = vld [vmem:[%s3] sm:$0xf]
        %v626 = vld [vmem:[%s3 + $0x4] sm:$0xf]
        %v627 = vld [vmem:[%s3 + $0x8] sm:$0xf]
        %v628 = vld [vmem:[%s3 + $0xc] sm:$0xf]
        %v629 = vpack.c.bf16 %v619, %v617
        %v630 = vpack.c.bf16 %v620, %v618
        %v631 = vpack.c.bf16 %v623, %v621
        %v632 = vpack.c.bf16 %v624, %v622
        %v633 = vld [vmem:[%s4] sm:$0xff]
        %v634 = vld [vmem:[%s4 + $0x8] sm:$0xff]
        %v635 = vld [vmem:[%s4 + $0x10] sm:$0xff]
        %v636 = vld [vmem:[%s4 + $0x18] sm:$0xff]
        %638 = vset.pattern.permute.xlu0 0
        %639 = vperm.xlu0 %638, %v633
        %v640 = vpop.permute.xlu0 %639
        %643 = vset.pattern.permute.xlu0 0
        %644 = vperm.xlu0 %643, %v634
        %v645 = vpop.permute.xlu0 %644
        %648 = vset.pattern.permute.xlu0 0
        %649 = vperm.xlu0 %648, %v635
        %v650 = vpop.permute.xlu0 %649
        %653 = vset.pattern.permute.xlu0 0
        %654 = vperm.xlu0 %653, %v636
        %v655 = vpop.permute.xlu0 %654
        %v661 = vunpack.c.l.b16 %v625
        %v662 = vunpack.c.l.b16 %v626
        %v663 = vunpack.c.l.b16 %v627
        %v664 = vunpack.c.l.b16 %v628
        %v665 = vpack.c.b16 %v662, %v661
        %v666 = vpack.c.b16 %v664, %v663
        %vm667 = vcmask 261120
        %v669 = vsel %vm667, %v665, 0
        %v672 = vsel %vm667, %v666, 0
        %674 = vmatprep.subr.bf16.mxu0 %v630
        %675 = vmatpush1.bf16.msra.mxu0 %v629
        %676 = vmatprep.subr.bf16.mxu0 %v632
        %677 = vmatpush1.bf16.msra.mxu0 %v631
        %678 = vmatprep.subr.bf16.mxu0 0
        %679 = vmatpush1.bf16.msra.mxu0 0
        %680 = vmatprep.subr.bf16.mxu0 0
        %681 = vmatpush1.bf16.msra.mxu0 0
        %682 = vmatprep.subr.bf16.mxu0 0
        %683 = vmatpush1.bf16.msra.mxu0 0
        %684 = vmatprep.subr.bf16.mxu0 0
        %685 = vmatpush1.bf16.msra.mxu0 0
        %686 = vmatprep.subr.bf16.mxu0 0
        %687 = vmatpush1.bf16.msra.mxu0 0
        %688 = vmatprep.subr.bf16.mxu0 0
        %689 = vmatpush1.bf16.msra.mxu0 0
        %690 = vmatprep.subr.bf16.mxu0 0
        %691 = vmatpush1.bf16.msra.mxu0 0
        %692 = vmatprep.subr.bf16.mxu0 0
        %693 = vmatpush1.bf16.msra.mxu0 0
        %694 = vmatprep.subr.bf16.mxu0 0
        %695 = vmatpush1.bf16.msra.mxu0 0
        %696 = vmatprep.subr.bf16.mxu0 0
        %697 = vmatpush1.bf16.msra.mxu0 0
        %698 = vmatprep.subr.bf16.mxu0 0
        %699 = vmatpush1.bf16.msra.mxu0 0
        %700 = vmatprep.subr.bf16.mxu0 0
        %701 = vmatpush1.bf16.msra.mxu0 0
        %702 = vmatprep.subr.bf16.mxu0 0
        %703 = vmatpush1.bf16.msra.mxu0 0
        %704 = vmatprep.subr.bf16.mxu0 0
        %705 = vmatpush1.bf16.msra.mxu0 0
        %706 = vmatprep.mubr.bf16.mxu0 0
        %707 = vmatmul.mubr.bf16.gmra.mrb[0].mxu0 %v669
        %v708 = vpop.f32.mrb[0].mxu0
        %v709 = vadd.f32 %v640, %v708
        %v710 = vpop.f32.mrb[0].mxu0
        %v711 = vadd.f32 %v640, %v710
        %v712 = vpop.f32.mrb[0].mxu0
        %v713 = vadd.f32 %v645, %v712
        %v714 = vpop.f32.mrb[0].mxu0
        %v715 = vadd.f32 %v645, %v714
        %716 = vmatprep.mubr.bf16.mxu0 0
        %717 = vmatmul.mubr.bf16.gmra.mrb[0].mxu0 %v672
        %v718 = vpop.f32.mrb[0].mxu0
        %v719 = vadd.f32 %v650, %v718
        %v720 = vpop.f32.mrb[0].mxu0
        %v721 = vadd.f32 %v650, %v720
        %v722 = vpop.f32.mrb[0].mxu0
        %v723 = vadd.f32 %v655, %v722
        %v724 = vpop.f32.mrb[0].mxu0
        %v725 = vadd.f32 %v655, %v724
        %726 = vdwg.mxu0
        %v727 = vmax.f32 %v709, 0.0
        %v728 = vmax.f32 %v711, 0.0
        %v729 = vmax.f32 %v713, 0.0
        %v730 = vmax.f32 %v715, 0.0
        %v731 = vmax.f32 %v719, 0.0
        %v732 = vmax.f32 %v721, 0.0
        %v733 = vmax.f32 %v723, 0.0
        %v734 = vmax.f32 %v725, 0.0
        %v735 = vadd.f32 %v727, %v483
        %v736 = vadd.f32 %v728, %v484
        %v737 = vadd.f32 %v729, 0.0
        %v738 = vadd.f32 %v730, 0.0
        %v739 = vadd.f32 %v731, 0.0
        %v740 = vadd.f32 %v732, 0.0
        %v741 = vadd.f32 %v733, 0.0
        %v742 = vadd.f32 %v734, 0.0
        %v743 = vld [vmem:[%s5] sm:$0xf]
        %v744 = vld [vmem:[%s5 + $0x4] sm:$0xf]
        %v745 = vld [vmem:[%s5 + $0x8] sm:$0xf]
        %v746 = vld [vmem:[%s5 + $0xc] sm:$0xf]
        %v747 = vpack.c.bf16 %v737, %v735
        %v748 = vpack.c.bf16 %v738, %v736
        %v749 = vpack.c.bf16 %v741, %v739
        %v750 = vpack.c.bf16 %v742, %v740
        %v751 = vld [vmem:[%s6] sm:$0xff]
        %v752 = vld [vmem:[%s6 + $0x8] sm:$0xff]
        %v753 = vld [vmem:[%s6 + $0x10] sm:$0xff]
        %v754 = vld [vmem:[%s6 + $0x18] sm:$0xff]
        %756 = vset.pattern.permute.xlu0 0
        %757 = vperm.xlu0 %756, %v751
        %v758 = vpop.permute.xlu0 %757
        %761 = vset.pattern.permute.xlu0 0
        %762 = vperm.xlu0 %761, %v752
        %v763 = vpop.permute.xlu0 %762
        %766 = vset.pattern.permute.xlu0 0
        %767 = vperm.xlu0 %766, %v753
        %v768 = vpop.permute.xlu0 %767
        %771 = vset.pattern.permute.xlu0 0
        %772 = vperm.xlu0 %771, %v754
        %v773 = vpop.permute.xlu0 %772
        %v779 = vunpack.c.l.b16 %v743
        %v780 = vunpack.c.l.b16 %v744
        %v781 = vunpack.c.l.b16 %v745
        %v782 = vunpack.c.l.b16 %v746
        %v783 = vpack.c.b16 %v780, %v779
        %v784 = vpack.c.b16 %v782, %v781
        %v786 = vsel %vm667, %v783, 0
        %v789 = vsel %vm667, %v784, 0
        %791 = vmatprep.subr.bf16.mxu0 %v748
        %792 = vmatpush1.bf16.msra.mxu0 %v747
        %793 = vmatprep.subr.bf16.mxu0 %v750
        %794 = vmatpush1.bf16.msra.mxu0 %v749
        %795 = vmatprep.subr.bf16.mxu0 0
        %796 = vmatpush1.bf16.msra.mxu0 0
        %797 = vmatprep.subr.bf16.mxu0 0
        %798 = vmatpush1.bf16.msra.mxu0 0
        %799 = vmatprep.subr.bf16.mxu0 0
        %800 = vmatpush1.bf16.msra.mxu0 0
        %801 = vmatprep.subr.bf16.mxu0 0
        %802 = vmatpush1.bf16.msra.mxu0 0
        %803 = vmatprep.subr.bf16.mxu0 0
        %804 = vmatpush1.bf16.msra.mxu0 0
        %805 = vmatprep.subr.bf16.mxu0 0
        %806 = vmatpush1.bf16.msra.mxu0 0
        %807 = vmatprep.subr.bf16.mxu0 0
        %808 = vmatpush1.bf16.msra.mxu0 0
        %809 = vmatprep.subr.bf16.mxu0 0
        %810 = vmatpush1.bf16.msra.mxu0 0
        %811 = vmatprep.subr.bf16.mxu0 0
        %812 = vmatpush1.bf16.msra.mxu0 0
        %813 = vmatprep.subr.bf16.mxu0 0
        %814 = vmatpush1.bf16.msra.mxu0 0
        %815 = vmatprep.subr.bf16.mxu0 0
        %816 = vmatpush1.bf16.msra.mxu0 0
        %817 = vmatprep.subr.bf16.mxu0 0
        %818 = vmatpush1.bf16.msra.mxu0 0
        %819 = vmatprep.subr.bf16.mxu0 0
        %820 = vmatpush1.bf16.msra.mxu0 0
        %821 = vmatprep.subr.bf16.mxu0 0
        %822 = vmatpush1.bf16.msra.mxu0 0
        %823 = vmatprep.mubr.bf16.mxu0 0
        %824 = vmatmul.mubr.bf16.gmra.mrb[0].mxu0 %v786
        %v825 = vpop.f32.mrb[0].mxu0
        %v826 = vadd.f32 %v758, %v825
        %v827 = vpop.f32.mrb[0].mxu0
        %v828 = vadd.f32 %v758, %v827
        %v829 = vpop.f32.mrb[0].mxu0
        %v830 = vadd.f32 %v763, %v829
        %v831 = vpop.f32.mrb[0].mxu0
        %v832 = vadd.f32 %v763, %v831
        %833 = vmatprep.mubr.bf16.mxu0 0
        %834 = vmatmul.mubr.bf16.gmra.mrb[0].mxu0 %v789
        %v835 = vpop.f32.mrb[0].mxu0
        %v836 = vadd.f32 %v768, %v835
        %v837 = vpop.f32.mrb[0].mxu0
        %v838 = vadd.f32 %v768, %v837
        %v839 = vpop.f32.mrb[0].mxu0
        %v840 = vadd.f32 %v773, %v839
        %v841 = vpop.f32.mrb[0].mxu0
        %v842 = vadd.f32 %v773, %v841
        %843 = vdwg.mxu0
        %v844 = vmax.f32 %v826, 0.0
        %v845 = vmax.f32 %v828, 0.0
        %v846 = vmax.f32 %v830, 0.0
        %v847 = vmax.f32 %v832, 0.0
        %v848 = vmax.f32 %v836, 0.0
        %v849 = vmax.f32 %v838, 0.0
        %v850 = vmax.f32 %v840, 0.0
        %v851 = vmax.f32 %v842, 0.0
        %v852 = vld [vmem:[%s7] sm:$0xf]
        %v853 = vld [vmem:[%s7 + $0x4] sm:$0xf]
        %v854 = vld [vmem:[%s7 + $0x8] sm:$0xf]
        %v855 = vld [vmem:[%s7 + $0xc] sm:$0xf]
        %v856 = vpack.c.bf16 %v846, %v844
        %v857 = vpack.c.bf16 %v847, %v845
        %v858 = vpack.c.bf16 %v850, %v848
        %v859 = vpack.c.bf16 %v851, %v849
        %v860 = vld [vmem:[%s8] sm:$0xff]
        %v861 = vld [vmem:[%s8 + $0x8] sm:$0xff]
        %v862 = vld [vmem:[%s8 + $0x10] sm:$0xff]
        %v863 = vld [vmem:[%s8 + $0x18] sm:$0xff]
        %865 = vset.pattern.permute.xlu0 0
        %866 = vperm.xlu0 %865, %v860
        %v867 = vpop.permute.xlu0 %866
        %870 = vset.pattern.permute.xlu0 0
        %871 = vperm.xlu0 %870, %v861
        %v872 = vpop.permute.xlu0 %871
        %875 = vset.pattern.permute.xlu0 0
        %876 = vperm.xlu0 %875, %v862
        %v877 = vpop.permute.xlu0 %876
        %880 = vset.pattern.permute.xlu0 0
        %881 = vperm.xlu0 %880, %v863
        %v882 = vpop.permute.xlu0 %881
        %v888 = vunpack.c.l.b16 %v852
        %v889 = vunpack.c.l.b16 %v853
        %v890 = vunpack.c.l.b16 %v854
        %v891 = vunpack.c.l.b16 %v855
        %v892 = vpack.c.b16 %v889, %v888
        %v893 = vpack.c.b16 %v891, %v890
        %v895 = vsel %vm667, %v892, 0
        %v898 = vsel %vm667, %v893, 0
        %900 = vmatprep.subr.bf16.mxu0 %v857
        %901 = vmatpush1.bf16.msra.mxu0 %v856
        %902 = vmatprep.subr.bf16.mxu0 %v859
        %903 = vmatpush1.bf16.msra.mxu0 %v858
        %904 = vmatprep.subr.bf16.mxu0 0
        %905 = vmatpush1.bf16.msra.mxu0 0
        %906 = vmatprep.subr.bf16.mxu0 0
        %907 = vmatpush1.bf16.msra.mxu0 0
        %908 = vmatprep.subr.bf16.mxu0 0
        %909 = vmatpush1.bf16.msra.mxu0 0
        %910 = vmatprep.subr.bf16.mxu0 0
        %911 = vmatpush1.bf16.msra.mxu0 0
        %912 = vmatprep.subr.bf16.mxu0 0
        %913 = vmatpush1.bf16.msra.mxu0 0
        %914 = vmatprep.subr.bf16.mxu0 0
        %915 = vmatpush1.bf16.msra.mxu0 0
        %916 = vmatprep.subr.bf16.mxu0 0
        %917 = vmatpush1.bf16.msra.mxu0 0
        %918 = vmatprep.subr.bf16.mxu0 0
        %919 = vmatpush1.bf16.msra.mxu0 0
        %920 = vmatprep.subr.bf16.mxu0 0
        %921 = vmatpush1.bf16.msra.mxu0 0
        %922 = vmatprep.subr.bf16.mxu0 0
        %923 = vmatpush1.bf16.msra.mxu0 0
        %924 = vmatprep.subr.bf16.mxu0 0
        %925 = vmatpush1.bf16.msra.mxu0 0
        %926 = vmatprep.subr.bf16.mxu0 0
        %927 = vmatpush1.bf16.msra.mxu0 0
        %928 = vmatprep.subr.bf16.mxu0 0
        %929 = vmatpush1.bf16.msra.mxu0 0
        %930 = vmatprep.subr.bf16.mxu0 0
        %931 = vmatpush1.bf16.msra.mxu0 0
        %932 = vmatprep.mubr.bf16.mxu0 0
        %933 = vmatmul.mubr.bf16.gmra.mrb[0].mxu0 %v895
        %v934 = vpop.f32.mrb[0].mxu0
        %v935 = vadd.f32 %v867, %v934
        %v936 = vpop.f32.mrb[0].mxu0
        %v937 = vadd.f32 %v867, %v936
        %v938 = vpop.f32.mrb[0].mxu0
        %v939 = vadd.f32 %v872, %v938
        %v940 = vpop.f32.mrb[0].mxu0
        %v941 = vadd.f32 %v872, %v940
        %942 = vmatprep.mubr.bf16.mxu0 0
        %943 = vmatmul.mubr.bf16.gmra.mrb[0].mxu0 %v898
        %v944 = vpop.f32.mrb[0].mxu0
        %v945 = vadd.f32 %v877, %v944
        %v946 = vpop.f32.mrb[0].mxu0
        %v947 = vadd.f32 %v877, %v946
        %v948 = vpop.f32.mrb[0].mxu0
        %v949 = vadd.f32 %v882, %v948
        %v950 = vpop.f32.mrb[0].mxu0
        %v951 = vadd.f32 %v882, %v950
        %952 = vdwg.mxu0
        %v953 = vmax.f32 %v935, 0.0
        %v954 = vmax.f32 %v937, 0.0
        %v955 = vmax.f32 %v939, 0.0
        %v956 = vmax.f32 %v941, 0.0
        %v957 = vmax.f32 %v945, 0.0
        %v958 = vmax.f32 %v947, 0.0
        %v959 = vmax.f32 %v949, 0.0
        %v960 = vmax.f32 %v951, 0.0
        %v961 = vadd.f32 %v953, %v735
        %v962 = vadd.f32 %v954, %v736
        %v963 = vadd.f32 %v955, %v737
        %v964 = vadd.f32 %v956, %v738
        %v965 = vadd.f32 %v957, %v739
        %v966 = vadd.f32 %v958, %v740
        %v967 = vadd.f32 %v959, %v741
        %v968 = vadd.f32 %v960, %v742
        %v969 = vld [vmem:[%s9] sm:$0xf]
        %v970 = vld [vmem:[%s9 + $0x4] sm:$0xf]
        %v971 = vld [vmem:[%s9 + $0x8] sm:$0xf]
        %v972 = vld [vmem:[%s9 + $0xc] sm:$0xf]
        %v973 = vpack.c.bf16 %v963, %v961
        %v974 = vpack.c.bf16 %v964, %v962
        %v975 = vpack.c.bf16 %v967, %v965
        %v976 = vpack.c.bf16 %v968, %v966
        %v977 = vld [vmem:[%s10] sm:$0xff]
        %v978 = vld [vmem:[%s10 + $0x8] sm:$0xff]
        %v979 = vld [vmem:[%s10 + $0x10] sm:$0xff]
        %v980 = vld [vmem:[%s10 + $0x18] sm:$0xff]
        %982 = vset.pattern.permute.xlu0 0
        %983 = vperm.xlu0 %982, %v977
        %v984 = vpop.permute.xlu0 %983
        %987 = vset.pattern.permute.xlu0 0
        %988 = vperm.xlu0 %987, %v978
        %v989 = vpop.permute.xlu0 %988
        %992 = vset.pattern.permute.xlu0 0
        %993 = vperm.xlu0 %992, %v979
        %v994 = vpop.permute.xlu0 %993
        %997 = vset.pattern.permute.xlu0 0
        %998 = vperm.xlu0 %997, %v980
        %v999 = vpop.permute.xlu0 %998
        %v1005 = vunpack.c.l.b16 %v969
        %v1006 = vunpack.c.l.b16 %v970
        %v1007 = vunpack.c.l.b16 %v971
        %v1008 = vunpack.c.l.b16 %v972
        %v1009 = vpack.c.b16 %v1006, %v1005
        %v1010 = vpack.c.b16 %v1008, %v1007
        %v1012 = vsel %vm667, %v1009, 0
        %v1015 = vsel %vm667, %v1010, 0
        %1017 = vmatprep.subr.bf16.mxu0 %v974
        %1018 = vmatpush1.bf16.msra.mxu0 %v973
        %1019 = vmatprep.subr.bf16.mxu0 %v976
        %1020 = vmatpush1.bf16.msra.mxu0 %v975
        %1021 = vmatprep.subr.bf16.mxu0 0
        %1022 = vmatpush1.bf16.msra.mxu0 0
        %1023 = vmatprep.subr.bf16.mxu0 0
        %1024 = vmatpush1.bf16.msra.mxu0 0
        %1025 = vmatprep.subr.bf16.mxu0 0
        %1026 = vmatpush1.bf16.msra.mxu0 0
        %1027 = vmatprep.subr.bf16.mxu0 0
        %1028 = vmatpush1.bf16.msra.mxu0 0
        %1029 = vmatprep.subr.bf16.mxu0 0
        %1030 = vmatpush1.bf16.msra.mxu0 0
        %1031 = vmatprep.subr.bf16.mxu0 0
        %1032 = vmatpush1.bf16.msra.mxu0 0
        %1033 = vmatprep.subr.bf16.mxu0 0
        %1034 = vmatpush1.bf16.msra.mxu0 0
        %1035 = vmatprep.subr.bf16.mxu0 0
        %1036 = vmatpush1.bf16.msra.mxu0 0
        %1037 = vmatprep.subr.bf16.mxu0 0
        %1038 = vmatpush1.bf16.msra.mxu0 0
        %1039 = vmatprep.subr.bf16.mxu0 0
        %1040 = vmatpush1.bf16.msra.mxu0 0
        %1041 = vmatprep.subr.bf16.mxu0 0
        %1042 = vmatpush1.bf16.msra.mxu0 0
        %1043 = vmatprep.subr.bf16.mxu0 0
        %1044 = vmatpush1.bf16.msra.mxu0 0
        %1045 = vmatprep.subr.bf16.mxu0 0
        %1046 = vmatpush1.bf16.msra.mxu0 0
        %1047 = vmatprep.subr.bf16.mxu0 0
        %1048 = vmatpush1.bf16.msra.mxu0 0
        %1049 = vmatprep.mubr.bf16.mxu0 0
        %1050 = vmatmul.mubr.bf16.gmra.mrb[0].mxu0 %v1012
        %v1051 = vpop.f32.mrb[0].mxu0
        %v1052 = vadd.f32 %v984, %v1051
        %v1053 = vpop.f32.mrb[0].mxu0
        %v1054 = vadd.f32 %v984, %v1053
        %v1055 = vpop.f32.mrb[0].mxu0
        %v1056 = vadd.f32 %v989, %v1055
        %v1057 = vpop.f32.mrb[0].mxu0
        %v1058 = vadd.f32 %v989, %v1057
        %1059 = vmatprep.mubr.bf16.mxu0 0
        %1060 = vmatmul.mubr.bf16.gmra.mrb[0].mxu0 %v1015
        %v1061 = vpop.f32.mrb[0].mxu0
        %v1062 = vadd.f32 %v994, %v1061
        %v1063 = vpop.f32.mrb[0].mxu0
        %v1064 = vadd.f32 %v994, %v1063
        %v1065 = vpop.f32.mrb[0].mxu0
        %v1066 = vadd.f32 %v999, %v1065
        %v1067 = vpop.f32.mrb[0].mxu0
        %v1068 = vadd.f32 %v999, %v1067
        %1069 = vdwg.mxu0
        %v1070 = vmax.f32 %v1052, 0.0
        %v1071 = vmax.f32 %v1054, 0.0
        %v1072 = vmax.f32 %v1056, 0.0
        %v1073 = vmax.f32 %v1058, 0.0
        %v1074 = vmax.f32 %v1062, 0.0
        %v1075 = vmax.f32 %v1064, 0.0
        %v1076 = vmax.f32 %v1066, 0.0
        %v1077 = vmax.f32 %v1068, 0.0
        %v1078 = vld [vmem:[%s11] sm:$0xf]
        %v1079 = vld [vmem:[%s11 + $0x4] sm:$0xf]
        %v1080 = vld [vmem:[%s11 + $0x8] sm:$0xf]
        %v1081 = vld [vmem:[%s11 + $0xc] sm:$0xf]
        %v1082 = vpack.c.bf16 %v1072, %v1070
        %v1083 = vpack.c.bf16 %v1073, %v1071
        %v1084 = vpack.c.bf16 %v1076, %v1074
        %v1085 = vpack.c.bf16 %v1077, %v1075
        %v1086 = vld [vmem:[%s12] sm:$0xff]
        %v1087 = vld [vmem:[%s12 + $0x8] sm:$0xff]
        %v1088 = vld [vmem:[%s12 + $0x10] sm:$0xff]
        %v1089 = vld [vmem:[%s12 + $0x18] sm:$0xff]
        %1091 = vset.pattern.permute.xlu0 0
        %1092 = vperm.xlu0 %1091, %v1086
        %v1093 = vpop.permute.xlu0 %1092
        %1096 = vset.pattern.permute.xlu0 0
        %1097 = vperm.xlu0 %1096, %v1087
        %v1098 = vpop.permute.xlu0 %1097
        %1101 = vset.pattern.permute.xlu0 0
        %1102 = vperm.xlu0 %1101, %v1088
        %v1103 = vpop.permute.xlu0 %1102
        %1106 = vset.pattern.permute.xlu0 0
        %1107 = vperm.xlu0 %1106, %v1089
        %v1108 = vpop.permute.xlu0 %1107
        %v1114 = vunpack.c.l.b16 %v1078
        %v1115 = vunpack.c.l.b16 %v1079
        %v1116 = vunpack.c.l.b16 %v1080
        %v1117 = vunpack.c.l.b16 %v1081
        %v1118 = vpack.c.b16 %v1115, %v1114
        %v1119 = vpack.c.b16 %v1117, %v1116
        %v1121 = vsel %vm667, %v1118, 0
        %v1124 = vsel %vm667, %v1119, 0
        %1126 = vmatprep.subr.bf16.mxu0 %v1083
        %1127 = vmatpush1.bf16.msra.mxu0 %v1082
        %1128 = vmatprep.subr.bf16.mxu0 %v1085
        %1129 = vmatpush1.bf16.msra.mxu0 %v1084
        %1130 = vmatprep.subr.bf16.mxu0 0
        %1131 = vmatpush1.bf16.msra.mxu0 0
        %1132 = vmatprep.subr.bf16.mxu0 0
        %1133 = vmatpush1.bf16.msra.mxu0 0
        %1134 = vmatprep.subr.bf16.mxu0 0
        %1135 = vmatpush1.bf16.msra.mxu0 0
        %1136 = vmatprep.subr.bf16.mxu0 0
        %1137 = vmatpush1.bf16.msra.mxu0 0
        %1138 = vmatprep.subr.bf16.mxu0 0
        %1139 = vmatpush1.bf16.msra.mxu0 0
        %1140 = vmatprep.subr.bf16.mxu0 0
        %1141 = vmatpush1.bf16.msra.mxu0 0
        %1142 = vmatprep.subr.bf16.mxu0 0
        %1143 = vmatpush1.bf16.msra.mxu0 0
        %1144 = vmatprep.subr.bf16.mxu0 0
        %1145 = vmatpush1.bf16.msra.mxu0 0
        %1146 = vmatprep.subr.bf16.mxu0 0
        %1147 = vmatpush1.bf16.msra.mxu0 0
        %1148 = vmatprep.subr.bf16.mxu0 0
        %1149 = vmatpush1.bf16.msra.mxu0 0
        %1150 = vmatprep.subr.bf16.mxu0 0
        %1151 = vmatpush1.bf16.msra.mxu0 0
        %1152 = vmatprep.subr.bf16.mxu0 0
        %1153 = vmatpush1.bf16.msra.mxu0 0
        %1154 = vmatprep.subr.bf16.mxu0 0
        %1155 = vmatpush1.bf16.msra.mxu0 0
        %1156 = vmatprep.subr.bf16.mxu0 0
        %1157 = vmatpush1.bf16.msra.mxu0 0
        %1158 = vmatprep.mubr.bf16.mxu0 0
        %1159 = vmatmul.mubr.bf16.gmra.mrb[0].mxu0 %v1121
        %v1160 = vpop.f32.mrb[0].mxu0
        %v1161 = vadd.f32 %v1093, %v1160
        %v1162 = vpop.f32.mrb[0].mxu0
        %v1163 = vadd.f32 %v1093, %v1162
        %v1164 = vpop.f32.mrb[0].mxu0
        %v1165 = vadd.f32 %v1098, %v1164
        %v1166 = vpop.f32.mrb[0].mxu0
        %v1167 = vadd.f32 %v1098, %v1166
        %1168 = vmatprep.mubr.bf16.mxu0 0
        %1169 = vmatmul.mubr.bf16.gmra.mrb[0].mxu0 %v1124
        %v1170 = vpop.f32.mrb[0].mxu0
        %v1171 = vadd.f32 %v1103, %v1170
        %v1172 = vpop.f32.mrb[0].mxu0
        %v1173 = vadd.f32 %v1103, %v1172
        %v1174 = vpop.f32.mrb[0].mxu0
        %v1175 = vadd.f32 %v1108, %v1174
        %v1176 = vpop.f32.mrb[0].mxu0
        %v1177 = vadd.f32 %v1108, %v1176
        %1178 = vdwg.mxu0
        %v1179 = vmax.f32 %v1161, 0.0
        %v1180 = vmax.f32 %v1163, 0.0
        %v1181 = vmax.f32 %v1165, 0.0
        %v1182 = vmax.f32 %v1167, 0.0
        %v1183 = vmax.f32 %v1171, 0.0
        %v1184 = vmax.f32 %v1173, 0.0
        %v1185 = vmax.f32 %v1175, 0.0
        %v1186 = vmax.f32 %v1177, 0.0
        %v1187 = vadd.f32 %v1179, %v961
        %v1188 = vadd.f32 %v1180, %v962
        %v1189 = vadd.f32 %v1181, %v963
        %v1190 = vadd.f32 %v1182, %v964
        %v1191 = vadd.f32 %v1183, %v965
        %v1192 = vadd.f32 %v1184, %v966
        %v1193 = vadd.f32 %v1185, %v967
        %v1194 = vadd.f32 %v1186, %v968
        %v1195 = vld [vmem:[%s13] sm:$0xff]
        %v1196 = vld [vmem:[%s13 + $0x8] sm:$0xff]
        %v1197 = vld [vmem:[%s13 + $0x10] sm:$0xff]
        %v1198 = vld [vmem:[%s13 + $0x18] sm:$0xff]
        %1200 = vset.pattern.permute.xlu0 0
        %1201 = vperm.xlu0 %1200, %v1195
        %v1202 = vpop.permute.xlu0 %1201
        %1205 = vset.pattern.permute.xlu0 0
        %1206 = vperm.xlu0 %1205, %v1196
        %v1207 = vpop.permute.xlu0 %1206
        %1210 = vset.pattern.permute.xlu0 0
        %1211 = vperm.xlu0 %1210, %v1197
        %v1212 = vpop.permute.xlu0 %1211
        %1215 = vset.pattern.permute.xlu0 0
        %1216 = vperm.xlu0 %1215, %v1198
        %v1217 = vpop.permute.xlu0 %1216
        %v1219 = vmul.f32 %v1202, %v1187
        %v1220 = vmul.f32 %v1202, %v1188
        %v1221 = vmul.f32 %v1207, %v1189
        %v1222 = vmul.f32 %v1207, %v1190
        %v1223 = vmul.f32 %v1212, %v1191
        %v1224 = vmul.f32 %v1212, %v1192
        %v1225 = vmul.f32 %v1217, %v1193
        %v1226 = vmul.f32 %v1217, %v1194
        %v1227 = vadd.f32 %v1219, %v1221
        %v1228 = vadd.f32 %v1227, %v1223
        %v1229 = vadd.f32 %v1228, %v1225
        %v1230 = vrot.slane %v1229, 4
        %v1231 = vadd.f32 %v1229, %v1230
        %v1232 = vrot.slane %v1231, 2
        %v1233 = vadd.f32 %v1231, %v1232
        %v1234 = vrot.slane %v1233, 1
        %v1235 = vadd.f32 %v1233, %v1234
        %v1236 = vadd.f32 %v1220, %v1222
        %v1237 = vadd.f32 %v1236, %v1224
        %v1238 = vadd.f32 %v1237, %v1226
        %v1239 = vrot.slane %v1238, 4
        %v1240 = vadd.f32 %v1238, %v1239
        %v1241 = vrot.slane %v1240, 2
        %v1242 = vadd.f32 %v1240, %v1241
        %v1243 = vrot.slane %v1242, 1
        %v1244 = vadd.f32 %v1242, %v1243
        %v1247 = vcombine.low %v1235, %v1244
        %v1249 = vunpack.c.l.s4 1966171168
        %v1250 = vunpack.c.0.s8 %v1249
        %v1251 = vlaneseq
        %v1252 = vshrl.u32 %v1251, 7
        %v1253 = vsub.s32 %v1250, %v1252
        %v1254 = vrot.slane %v1247, %v1253
        %v1256 = vunpack.c.l.s4 1966171168
        %v1257 = vunpack.c.0.s8 %v1256
        %v1258 = vlaneseq
        %v1259 = vshrl.u32 %v1258, 7
        %v1260 = vsub.s32 %v1257, %v1259
        %v1261 = vrot.slane %v1254, %v1260
        %v1263 = vlaneseq
        %vm1264 = vcmp.ge.s32.totalorder %v1263, 0
        %vm1265 = vcmp.lt.s32.totalorder %v1263, 256
        %vm1266 = vmand %vm1264, %vm1265
        %1267 = vst.msk [vmem:[%s461] sm:$0x3] %vm1266, %v1261
        %s1268 = sand.u32 %s335, 1
        %s1269 = scalar_lea.sflag [#allocation3], %s1268
        %s1270 = sand.u32 %s335, 1
        %s1271 = smul.addr %s1270, 2
        %s1272 = scalar_lea.vmem [#allocation2], %s1271
        // Predicated region
        $region77: #{resnet_relu_base_forward.1} parent=75 // pred_check
          %p1273 = pneg %p345
        $region78: #{resnet_relu_base_forward.1} parent=75 // pred_check_branch
          %1275 = sbr.rel (%p1273) target = $region80
        $region79: #{resnet_relu_base_forward.1} parent=75 // pred_region
          %s1276 = smul.u32 2, %s28
          %s1278 = ssub.s32 32, 32
          %1279 = vsyncadd %s1269, %s1278
          %s1280 = smul.addr %s1276, 16
          %s1281 = scalar_lea.hbm %s14, %s1280
          %s1283 = sshll.u32 %s1272, 4
          %s1284 = int_to_ptr.vmem [resolvable:$true] %s1283
          %1286 = dma.vmem_to_hbm [thread:$0]  %s1284, 32, %s1281, %s1269
        $region80: #{resnet_relu_base_forward.1} parent=75 // pred_fallthru
          _
      $region76: #{resnet_relu_base_forward.1} parent=5 // pred_fallthru
        _
      %p1287 = scmp.le.s32.totalorder 2, %s23
      // Predicated region
      $region81: #{resnet_relu_base_forward.1} parent=5 // pred_check
        %p1288 = pneg %p1287
      $region82: #{resnet_relu_base_forward.1} parent=5 // pred_check_branch
        %1290 = sbr.rel (%p1288) target = $region84
      $region83: #{resnet_relu_base_forward.1} parent=5 // pred_region
        %s1291 = ssub.s32 %s23, 2
        // Predicated region
        $region85: #{resnet_relu_base_forward.1} parent=83 // pred_check
          %p1292 = pneg %p351
        $region86: #{resnet_relu_base_forward.1} parent=83 // pred_check_branch
          %1294 = sbr.rel (%p1292) target = $region88
        $region87: #{resnet_relu_base_forward.1} parent=83 // pred_region
          %s1295 = sand.u32 %s336, 1
          %s1296 = scalar_lea.sflag [#allocation3], %s1295
          %s1297 = sand.u32 %s336, 1
          %s1298 = smul.addr %s1297, 2
          %s1299 = scalar_lea.vmem [#allocation2], %s1298
          %1300 = dma.done %s1296, 32
        $region88: #{resnet_relu_base_forward.1} parent=83 // pred_fallthru
          _
      $region84: #{resnet_relu_base_forward.1} parent=5 // pred_fallthru
        _
    $region6: #{resnet_relu_base_forward.1} parent=1 // loop_footer
      %s27 = sadd.s32 1, %s23
    $region7: #{resnet_relu_base_forward.1} parent=1 // loop_footer_branch
      %22 = sbr.rel target = $region3
    $region8: #{resnet_relu_base_forward.1} parent=1 // loop_exit
      _
    %1301 = vsyncpa [#allocation3], 1
    %s1302 = scalar_lea.sflag [#allocation3], 1
    %1303 = vsyncpa %s1302, 1

</llo_original>
